<compile_context>
chip_gen: v7x
topology: tpu7x:2x2x1
jax: 0.10.0
libtpu: 0.0.40
codegen_flags: <defaults>
</compile_context>

<pallas_src>
import functools
import math

import jax
import jax.numpy as jnp
from jax.experimental import pallas as pl
from jax.experimental.pallas import tpu as pltpu

_NEG_INF = -1e30  # finite mask value: avoids inf-inf NaN corner cases entirely


def _round_up(x, m):
    return (x + m - 1) // m * m


def _vmem_limit_bytes():
    """~75% of physical VMEM, capped at 96 MiB (v5e/v6e: 96 MiB, v7x: 48 MiB)."""
    try:
        cap = pltpu.get_tpu_info().vmem_capacity_bytes
    except Exception:
        cap = 64 * 1024 * 1024
    return int(min(96 * 1024 * 1024, cap * 3 // 4))


# --------------------------------------------------------------------------
# QKV projection: x @ [Wq|Wk|Wv], written directly in [B, H, N, dh] layout.
# --------------------------------------------------------------------------
def _qkv_proj_kernel(x_ref, wq_ref, wk_ref, wv_ref, q_ref, k_ref, v_ref,
                     *, heads, dim_head):
    mxu_dtype = wq_ref.dtype
    xb = x_ref[0].astype(mxu_dtype)                        # (tile_n, dim)
    for w_ref, o_ref in ((wq_ref, q_ref), (wk_ref, k_ref), (wv_ref, v_ref)):
        acc = jnp.dot(xb, w_ref[...],
                      preferred_element_type=jnp.float32)  # (tile_n, inner) f32
        for h in range(heads):                              # head split inside kernel
            o_ref[0, h, :, :] = acc[:, h * dim_head:(h + 1) * dim_head].astype(o_ref.dtype)


def _qkv_projection(x, w_q, w_k, w_v, *, heads, dim_head, tile_n, out_dtype,
                    vmem_limit):
    B, N_pad, dim = x.shape
    inner = heads * dim_head
    grid = (B, N_pad // tile_n)

    x_spec = pl.BlockSpec((1, tile_n, dim), lambda b, i: (b, i, 0))
    w_spec = pl.BlockSpec((dim, inner), lambda b, i: (0, 0))        # resident
    o_spec = pl.BlockSpec((1, heads, tile_n, dim_head), lambda b, i: (b, 0, i, 0))
    out_sds = jax.ShapeDtypeStruct((B, heads, N_pad, dim_head), out_dtype)

    flops = 2 * B * N_pad * dim * 3 * inner
    bytes_accessed = (B * N_pad * dim * x.dtype.itemsize
                      + 3 * dim * inner * w_q.dtype.itemsize
                      + 3 * B * N_pad * inner * jnp.dtype(out_dtype).itemsize)

    return pl.pallas_call(
        functools.partial(_qkv_proj_kernel, heads=heads, dim_head=dim_head),
        out_shape=(out_sds, out_sds, out_sds),
        grid_spec=pltpu.PrefetchScalarGridSpec(
            num_scalar_prefetch=0,
            grid=grid,
            in_specs=[x_spec, w_spec, w_spec, w_spec],
            out_specs=(o_spec, o_spec, o_spec),
        ),
        compiler_params=pltpu.CompilerParams(
            dimension_semantics=("parallel", "parallel"),
            vmem_limit_bytes=vmem_limit),
        cost_estimate=pl.CostEstimate(flops=flops, transcendentals=0,
                                      bytes_accessed=bytes_accessed),
    )(x, w_q, w_k, w_v)


# --------------------------------------------------------------------------
# Flash attention: all heads per step, K/V resident (or chunked), online softmax.
# --------------------------------------------------------------------------
def _flash_attn_kernel(q_ref, k_ref, v_ref, o_ref, m_sc, l_sc, acc_sc,
                       *, scale, kv_len, kv_rows, block_kv, heads, dim_head,
                       needs_mask):
    chunk = pl.program_id(2)
    mxu_dtype = k_ref.dtype

    @pl.when(chunk == 0)
    def _():
        m_sc[...] = jnp.full_like(m_sc, _NEG_INF)
        l_sc[...] = jnp.zeros_like(l_sc)
        acc_sc[...] = jnp.zeros_like(acc_sc)

    # Scale q (H*block_q*dh elems) instead of the (H*block_q*block_kv) score tile.
    q = (q_ref[0].astype(jnp.float32) * jnp.float32(scale)).astype(mxu_dtype)  # (H,bq,dh)

    n_inner = kv_rows // block_kv
    chunk_base = chunk * kv_rows

    def kv_step(j, carry):
        start = pl.multiple_of(j * block_kv, block_kv)
        k = k_ref[0, :, pl.ds(start, block_kv), :]          # (H, bkv, dh)
        v = v_ref[0, :, pl.ds(start, block_kv), :]
        s = jnp.einsum('hqd,hkd->hqk', q, k,
                       preferred_element_type=jnp.float32)  # (H, bq, bkv) f32
        if needs_mask:
            col = chunk_base + start + jax.lax.broadcasted_iota(jnp.int32, s.shape, 2)
            s = jnp.where(col < kv_len, s, _NEG_INF)
        m_prev = m_sc[...]
        m_new = jnp.maximum(m_prev, s.max(axis=-1, keepdims=True))
        alpha = jnp.exp(m_prev - m_new)
        p = jnp.exp(s - m_new)
        l_sc[...] = alpha * l_sc[...] + p.sum(axis=-1, keepdims=True)
        acc_sc[...] = alpha * acc_sc[...] + jnp.einsum(
            'hqk,hkd->hqd', p.astype(mxu_dtype), v,
            preferred_element_type=jnp.float32)
        m_sc[...] = m_new
        return carry

    jax.lax.fori_loop(0, n_inner, kv_step, 0, unroll=n_inner <= 8)

    @pl.when(chunk == pl.num_programs(2) - 1)
    def _():
        o = acc_sc[...] * pl.reciprocal(l_sc[...], approx=True)        # (H, bq, dh)
        o = jnp.concatenate([o[h] for h in range(heads)], axis=-1)     # (bq, H*dh) lane-dense
        o_ref[0] = o.astype(o_ref.dtype)


def _flash_attention(q, k, v, *, scale, kv_len, block_q, block_kv, out_dtype,
                     vmem_limit):
    B, H, N_pad, dh = q.shape
    inner = H * dh
    kv_itemsize = jnp.dtype(k.dtype).itemsize

    # Keep K/V resident across q tiles when they fit the VMEM budget; otherwise
    # stream them in the largest chunks that do fit (online softmax handles both).
    n_kv_blocks = N_pad // block_kv
    budget = int(vmem_limit * 0.6)
    kv_chunks = n_kv_blocks
    for c in range(1, n_kv_blocks + 1):
        if n_kv_blocks % c:
            continue
        if 4 * (N_pad // c) * inner * kv_itemsize <= budget:   # K+V, double-buffered
            kv_chunks = c
            break
    kv_rows = N_pad // kv_chunks

    grid = (B, N_pad // block_q, kv_chunks)
    needs_mask = kv_len != N_pad

    kv_passes = 1 if kv_chunks == 1 else (N_pad // block_q)
    flops = 4 * B * H * N_pad * N_pad * dh
    transcendentals = B * H * N_pad * N_pad
    bytes_accessed = ((q.size + kv_passes * (k.size + v.size)) * kv_itemsize
                      + B * N_pad * inner * jnp.dtype(out_dtype).itemsize)

    kernel = functools.partial(
        _flash_attn_kernel, scale=scale, kv_len=kv_len, kv_rows=kv_rows,
        block_kv=block_kv, heads=H, dim_head=dh, needs_mask=needs_mask)

    return pl.pallas_call(
        kernel,
        out_shape=jax.ShapeDtypeStruct((B, N_pad, inner), out_dtype),
        grid_spec=pltpu.PrefetchScalarGridSpec(
            num_scalar_prefetch=0,
            grid=grid,
            in_specs=[
                pl.BlockSpec((1, H, block_q, dh), lambda b, i, c: (b, 0, i, 0)),   # Q
                pl.BlockSpec((1, H, kv_rows, dh), lambda b, i, c: (b, 0, c, 0)),   # K (resident if c==0 only)
                pl.BlockSpec((1, H, kv_rows, dh), lambda b, i, c: (b, 0, c, 0)),   # V
            ],
            out_specs=pl.BlockSpec((1, block_q, inner), lambda b, i, c: (b, i, 0)),
            scratch_shapes=[
                pltpu.VMEM((H, block_q, 1), jnp.float32),    # running max
                pltpu.VMEM((H, block_q, 1), jnp.float32),    # running denom
                pltpu.VMEM((H, block_q, dh), jnp.float32),   # output accumulator
            ],
        ),
        compiler_params=pltpu.CompilerParams(
            dimension_semantics=("parallel", "parallel", "arbitrary"),
            vmem_limit_bytes=vmem_limit),
        cost_estimate=pl.CostEstimate(flops=flops, transcendentals=transcendentals,
                                      bytes_accessed=bytes_accessed),
    )(q, k, v)


# --------------------------------------------------------------------------
# Output projection: out = x @ W (+ b), f32 accumulation on the MXU.
# --------------------------------------------------------------------------
def _linear_kernel(x_ref, w_ref, b_ref, o_ref):
    acc = jnp.dot(x_ref[...].astype(w_ref.dtype), w_ref[...],
                  preferred_element_type=jnp.float32)
    acc = acc + b_ref[...].astype(jnp.float32)
    o_ref[...] = acc.astype(o_ref.dtype)


def _linear_kernel_nobias(x_ref, w_ref, o_ref):
    acc = jnp.dot(x_ref[...].astype(w_ref.dtype), w_ref[...],
                  preferred_element_type=jnp.float32)
    o_ref[...] = acc.astype(o_ref.dtype)


def _linear(x2d, w, b=None, *, out_dtype, vmem_limit, tile_m=512):
    tokens, K = x2d.shape
    Nf = w.shape[1]

    tile_m = min(tile_m, _round_up(tokens, 8))
    pad = (-tokens) % tile_m
    if pad:
        x2d = jnp.pad(x2d, ((0, pad), (0, 0)))
    m_pad = x2d.shape[0]
    grid = (m_pad // tile_m,)

    in_specs = [pl.BlockSpec((tile_m, K), lambda i: (i, 0)),
                pl.BlockSpec((K, Nf), lambda i: (0, 0))]
    operands = [x2d, w]
    if b is not None:
        in_specs.append(pl.BlockSpec((1, Nf), lambda i: (0, 0)))
        operands.append(b.reshape(1, Nf))
        kernel = _linear_kernel
    else:
        kernel = _linear_kernel_nobias      # no bias array, no bias DMA

    flops = 2 * m_pad * K * Nf
    bytes_accessed = (m_pad * K * x2d.dtype.itemsize + K * Nf * w.dtype.itemsize
                      + m_pad * Nf * jnp.dtype(out_dtype).itemsize)

    out = pl.pallas_call(
        kernel,
        out_shape=jax.ShapeDtypeStruct((m_pad, Nf), out_dtype),
        grid_spec=pltpu.PrefetchScalarGridSpec(
            num_scalar_prefetch=0,
            grid=grid,
            in_specs=in_specs,
            out_specs=pl.BlockSpec((tile_m, Nf), lambda i: (i, 0)),
        ),
        compiler_params=pltpu.CompilerParams(
            dimension_semantics=("parallel",),
            vmem_limit_bytes=vmem_limit),
        cost_estimate=pl.CostEstimate(flops=flops, transcendentals=0,
                                      bytes_accessed=bytes_accessed),
    )(*operands)
    if pad:
        out = out[:tokens]
    return out


# --------------------------------------------------------------------------
# Full module forward (self-attention path, z=None).
# --------------------------------------------------------------------------
@functools.partial(jax.jit,
                   static_argnames=("heads", "dim_head", "block_n", "compute_dtype"))
def attention_forward(x, w_qkv, w_out, b_out, *, heads, dim_head,
                      block_n=256, compute_dtype=jnp.bfloat16):
    """x: [B, N, dim] -> [B, N, dim] (or [B, N, inner] if w_out is None)."""
    B, N, dim = x.shape
    inner = heads * dim_head
    vmem_limit = _vmem_limit_bytes()

    block_n = min(block_n, _round_up(N, 8))
    N_pad = _round_up(N, block_n)
    if N_pad != N:
        x = jnp.pad(x, ((0, 0), (0, N_pad - N), (0, 0)))

    # Split the fused QKV weight once (tiny) and feed the MXU its native dtype.
    w_q = w_qkv[:, :inner].astype(compute_dtype)
    w_k = w_qkv[:, inner:2 * inner].astype(compute_dtype)
    w_v = w_qkv[:, 2 * inner:].astype(compute_dtype)

    # ---- QKV projection, written directly as [B, H, N_pad, dh] (no XLA transpose) ----
    q, k, v = _qkv_projection(x, w_q, w_k, w_v, heads=heads, dim_head=dim_head,
                              tile_n=block_n, out_dtype=compute_dtype,
                              vmem_limit=vmem_limit)

    # ---- scaled-dot-product attention, output already head-merged [B, N_pad, inner] ----
    scale = float(dim_head) ** -0.5
    o = _flash_attention(q, k, v, scale=scale, kv_len=N,
                         block_q=block_n, block_kv=block_n,
                         out_dtype=compute_dtype, vmem_limit=vmem_limit)

    o2d = o.reshape(B * N_pad, inner)                     # pure reshape, no transpose

    # ---- output projection (+ Dropout(p=0) == identity) ----
    if w_out is None:                                      # project_out == False -> Identity
        out2d = o2d.astype(x.dtype)
    else:
        out2d = _linear(o2d, w_out.astype(compute_dtype), b_out,
                        out_dtype=x.dtype, vmem_limit=vmem_limit)

    out = out2d.reshape(B, N_pad, -1)
    if N_pad != N:
        out = out[:, :N]
    return out


def init_attention_params(key, dim, heads, dim_head, dtype=jnp.float32):
    """nn.Linear-style init; weights stored transposed so kernels compute x @ W."""
    inner = heads * dim_head
    k1, k2, k3 = jax.random.split(key, 3)
    bq = 1.0 / math.sqrt(dim)
    bo = 1.0 / math.sqrt(inner)
    w_qkv = jax.random.uniform(k1, (dim, 3 * inner), dtype, -bq, bq)
    w_out = jax.random.uniform(k2, (inner, dim), dtype, -bo, bo)
    b_out = jax.random.uniform(k3, (dim,), dtype, -bo, bo)
    return w_qkv, w_out, b_out


def _reference(x, w_qkv, w_out, b_out, heads, dim_head):
    B, N, dim = x.shape
    inner = heads * dim_head
    qkv = x @ w_qkv
    q, k, v = jnp.split(qkv, 3, axis=-1)
    split = lambda t: t.reshape(B, N, heads, dim_head).transpose(0, 2, 1, 3)
    q, k, v = map(split, (q, k, v))
    dots = jnp.einsum('bhnd,bhmd->bhnm', q, k) * (float(dim_head) ** -0.5)
    attn = jax.nn.softmax(dots, axis=-1)
    o = jnp.einsum('bhnm,bhmd->bhnd', attn, v)
    o = o.transpose(0, 2, 1, 3).reshape(B, N, inner)
    return o @ w_out + b_out


if __name__ == "__main__":
    key = jax.random.PRNGKey(0)
    kx, kp = jax.random.split(key)

    # Small shapes consistent with the module.
    B, N, dim = 2, 8, 16
    heads, dim_head = 2, 8

    x = jax.random.normal(kx, (B, N, dim), dtype=jnp.float32)
    w_qkv, w_out, b_out = init_attention_params(kp, dim, heads, dim_head)
    ref = _reference(x, w_qkv, w_out, b_out, heads, dim_head)

    # Default fast path: bf16 MXU operands, f32 accumulation.
    out_bf16 = attention_forward(x, w_qkv, w_out, b_out, heads=heads, dim_head=dim_head)
    out_bf16 = jax.block_until_ready(out_bf16)
    assert out_bf16.shape == (B, N, dim)
    assert out_bf16.dtype == x.dtype
    assert jnp.allclose(out_bf16, ref, atol=3e-2, rtol=3e-2), \
        float(jnp.max(jnp.abs(out_bf16 - ref)))

    # Full-f32 path for a tighter numerical check (same kernels, casts are no-ops).
    out_f32 = attention_forward(x, w_qkv, w_out, b_out, heads=heads, dim_head=dim_head,
                                compute_dtype=jnp.float32)
    out_f32 = jax.block_until_ready(out_f32)
    assert jnp.allclose(out_f32, ref, atol=1e-2, rtol=1e-2), \
        float(jnp.max(jnp.abs(out_f32 - ref)))

    print("KERNEL_OK")
</pallas_src>

<mosaic_0001>
module attributes {stable_mosaic.version = 11 : i64} {
  func.func @_qkv_proj_kernel(%arg0: i32, %arg1: i32, %arg2: memref<1x8x16xf32, #tpu.memory_space<vmem>>, %arg3: memref<16x16xbf16, #tpu.memory_space<vmem>>, %arg4: memref<16x16xbf16, #tpu.memory_space<vmem>>, %arg5: memref<16x16xbf16, #tpu.memory_space<vmem>>, %arg6: memref<1x2x8x8xbf16, #tpu.memory_space<vmem>>, %arg7: memref<1x2x8x8xbf16, #tpu.memory_space<vmem>>, %arg8: memref<1x2x8x8xbf16, #tpu.memory_space<vmem>>) attributes {dimension_semantics = [#tpu.dimension_semantics<parallel>, #tpu.dimension_semantics<parallel>], iteration_bounds = array<i64: 2, 1>, scalar_prefetch = 0 : i64, scratch_operands = 0 : i64, tpu.core_type = #tpu.core_type<tc>, window_params = [{transform_indices = @transform_0, window_bounds = array<i64: 1, 8, 16>}, {pipeline_mode = #tpu.pipeline_mode<synchronous>, transform_indices = @transform_1, window_bounds = array<i64: 16, 16>}, {pipeline_mode = #tpu.pipeline_mode<synchronous>, transform_indices = @transform_2, window_bounds = array<i64: 16, 16>}, {pipeline_mode = #tpu.pipeline_mode<synchronous>, transform_indices = @transform_3, window_bounds = array<i64: 16, 16>}, {transform_indices = @transform_4, window_bounds = array<i64: 1, 2, 8, 8>}, {transform_indices = @transform_5, window_bounds = array<i64: 1, 2, 8, 8>}, {transform_indices = @transform_6, window_bounds = array<i64: 1, 2, 8, 8>}]} {
    %c0 = arith.constant 0 : index
    %c0_0 = arith.constant 0 : index
    %c0_1 = arith.constant 0 : index
    %0 = vector.load %arg2[%c0, %c0_0, %c0_1] : memref<1x8x16xf32, #tpu.memory_space<vmem>>, vector<1x8x16xf32>
    %1 = vector.shape_cast %0 : vector<1x8x16xf32> to vector<8x16xf32>
    %2 = arith.truncf %1 : vector<8x16xf32> to vector<8x16xbf16>
    %c0_2 = arith.constant 0 : index
    %c0_3 = arith.constant 0 : index
    %3 = vector.load %arg3[%c0_2, %c0_3] : memref<16x16xbf16, #tpu.memory_space<vmem>>, vector<16x16xbf16>
    %cst = arith.constant dense<0.000000e+00> : vector<8x16xf32>
    %4 = tpu.matmul %2, %3, %cst {dimension_numbers = #tpu.dot_dimension_numbers<[1], [0], [0], [1], [0, 0, 1, 1], [], []>} : vector<8x16xbf16>, vector<16x16xbf16>, vector<8x16xf32> -> vector<8x16xf32>
    %5 = vector.extract_strided_slice %4 {offsets = [0, 0], sizes = [8, 8], strides = [1, 1]} : vector<8x16xf32> to vector<8x8xf32>
    %6 = arith.truncf %5 : vector<8x8xf32> to vector<8x8xbf16>
    %c0_4 = arith.constant 0 : index
    %c0_5 = arith.constant 0 : index
    %c0_6 = arith.constant 0 : index
    %c0_7 = arith.constant 0 : index
    %7 = vector.load %arg6[%c0_4, %c0_5, %c0_6, %c0_7] : memref<1x2x8x8xbf16, #tpu.memory_space<vmem>>, vector<1x1x8x8xbf16>
    %8 = vector.shape_cast %7 : vector<1x1x8x8xbf16> to vector<8x8xbf16>
    %9 = vector.shape_cast %6 : vector<8x8xbf16> to vector<1x1x8x8xbf16>
    tpu.vector_store %arg6[%c0_4, %c0_5, %c0_6, %c0_7], %9 {strides = array<i32>} : memref<1x2x8x8xbf16, #tpu.memory_space<vmem>>, vector<1x1x8x8xbf16>,
    %10 = vector.extract_strided_slice %4 {offsets = [0, 8], sizes = [8, 8], strides = [1, 1]} : vector<8x16xf32> to vector<8x8xf32>
    %11 = arith.truncf %10 : vector<8x8xf32> to vector<8x8xbf16>
    %c0_8 = arith.constant 0 : index
    %c1 = arith.constant 1 : index
    %c0_9 = arith.constant 0 : index
    %c0_10 = arith.constant 0 : index
    %12 = vector.load %arg6[%c0_8, %c1, %c0_9, %c0_10] : memref<1x2x8x8xbf16, #tpu.memory_space<vmem>>, vector<1x1x8x8xbf16>
    %13 = vector.shape_cast %12 : vector<1x1x8x8xbf16> to vector<8x8xbf16>
    %14 = vector.shape_cast %11 : vector<8x8xbf16> to vector<1x1x8x8xbf16>
    tpu.vector_store %arg6[%c0_8, %c1, %c0_9, %c0_10], %14 {strides = array<i32>} : memref<1x2x8x8xbf16, #tpu.memory_space<vmem>>, vector<1x1x8x8xbf16>,
    %c0_11 = arith.constant 0 : index
    %c0_12 = arith.constant 0 : index
    %15 = vector.load %arg4[%c0_11, %c0_12] : memref<16x16xbf16, #tpu.memory_space<vmem>>, vector<16x16xbf16>
    %cst_13 = arith.constant dense<0.000000e+00> : vector<8x16xf32>
    %16 = tpu.matmul %2, %15, %cst_13 {dimension_numbers = #tpu.dot_dimension_numbers<[1], [0], [0], [1], [0, 0, 1, 1], [], []>} : vector<8x16xbf16>, vector<16x16xbf16>, vector<8x16xf32> -> vector<8x16xf32>
    %17 = vector.extract_strided_slice %16 {offsets = [0, 0], sizes = [8, 8], strides = [1, 1]} : vector<8x16xf32> to vector<8x8xf32>
    %18 = arith.truncf %17 : vector<8x8xf32> to vector<8x8xbf16>
    %c0_14 = arith.constant 0 : index
    %c0_15 = arith.constant 0 : index
    %c0_16 = arith.constant 0 : index
    %c0_17 = arith.constant 0 : index
    %19 = vector.load %arg7[%c0_14, %c0_15, %c0_16, %c0_17] : memref<1x2x8x8xbf16, #tpu.memory_space<vmem>>, vector<1x1x8x8xbf16>
    %20 = vector.shape_cast %19 : vector<1x1x8x8xbf16> to vector<8x8xbf16>
    %21 = vector.shape_cast %18 : vector<8x8xbf16> to vector<1x1x8x8xbf16>
    tpu.vector_store %arg7[%c0_14, %c0_15, %c0_16, %c0_17], %21 {strides = array<i32>} : memref<1x2x8x8xbf16, #tpu.memory_space<vmem>>, vector<1x1x8x8xbf16>,
    %22 = vector.extract_strided_slice %16 {offsets = [0, 8], sizes = [8, 8], strides = [1, 1]} : vector<8x16xf32> to vector<8x8xf32>
    %23 = arith.truncf %22 : vector<8x8xf32> to vector<8x8xbf16>
    %c0_18 = arith.constant 0 : index
    %c1_19 = arith.constant 1 : index
    %c0_20 = arith.constant 0 : index
    %c0_21 = arith.constant 0 : index
    %24 = vector.load %arg7[%c0_18, %c1_19, %c0_20, %c0_21] : memref<1x2x8x8xbf16, #tpu.memory_space<vmem>>, vector<1x1x8x8xbf16>
    %25 = vector.shape_cast %24 : vector<1x1x8x8xbf16> to vector<8x8xbf16>
    %26 = vector.shape_cast %23 : vector<8x8xbf16> to vector<1x1x8x8xbf16>
    tpu.vector_store %arg7[%c0_18, %c1_19, %c0_20, %c0_21], %26 {strides = array<i32>} : memref<1x2x8x8xbf16, #tpu.memory_space<vmem>>, vector<1x1x8x8xbf16>,
    %c0_22 = arith.constant 0 : index
    %c0_23 = arith.constant 0 : index
    %27 = vector.load %arg5[%c0_22, %c0_23] : memref<16x16xbf16, #tpu.memory_space<vmem>>, vector<16x16xbf16>
    %cst_24 = arith.constant dense<0.000000e+00> : vector<8x16xf32>
    %28 = tpu.matmul %2, %27, %cst_24 {dimension_numbers = #tpu.dot_dimension_numbers<[1], [0], [0], [1], [0, 0, 1, 1], [], []>} : vector<8x16xbf16>, vector<16x16xbf16>, vector<8x16xf32> -> vector<8x16xf32>
    %29 = vector.extract_strided_slice %28 {offsets = [0, 0], sizes = [8, 8], strides = [1, 1]} : vector<8x16xf32> to vector<8x8xf32>
    %30 = arith.truncf %29 : vector<8x8xf32> to vector<8x8xbf16>
    %c0_25 = arith.constant 0 : index
    %c0_26 = arith.constant 0 : index
    %c0_27 = arith.constant 0 : index
    %c0_28 = arith.constant 0 : index
    %31 = vector.load %arg8[%c0_25, %c0_26, %c0_27, %c0_28] : memref<1x2x8x8xbf16, #tpu.memory_space<vmem>>, vector<1x1x8x8xbf16>
    %32 = vector.shape_cast %31 : vector<1x1x8x8xbf16> to vector<8x8xbf16>
    %33 = vector.shape_cast %30 : vector<8x8xbf16> to vector<1x1x8x8xbf16>
    tpu.vector_store %arg8[%c0_25, %c0_26, %c0_27, %c0_28], %33 {strides = array<i32>} : memref<1x2x8x8xbf16, #tpu.memory_space<vmem>>, vector<1x1x8x8xbf16>,
    %34 = vector.extract_strided_slice %28 {offsets = [0, 8], sizes = [8, 8], strides = [1, 1]} : vector<8x16xf32> to vector<8x8xf32>
    %35 = arith.truncf %34 : vector<8x8xf32> to vector<8x8xbf16>
    %c0_29 = arith.constant 0 : index
    %c1_30 = arith.constant 1 : index
    %c0_31 = arith.constant 0 : index
    %c0_32 = arith.constant 0 : index
    %36 = vector.load %arg8[%c0_29, %c1_30, %c0_31, %c0_32] : memref<1x2x8x8xbf16, #tpu.memory_space<vmem>>, vector<1x1x8x8xbf16>
    %37 = vector.shape_cast %36 : vector<1x1x8x8xbf16> to vector<8x8xbf16>
    %38 = vector.shape_cast %35 : vector<8x8xbf16> to vector<1x1x8x8xbf16>
    tpu.vector_store %arg8[%c0_29, %c1_30, %c0_31, %c0_32], %38 {strides = array<i32>} : memref<1x2x8x8xbf16, #tpu.memory_space<vmem>>, vector<1x1x8x8xbf16>,
    return
  }
  func.func @transform_0(%arg0: i32, %arg1: i32) -> (i32, i32, i32) {
    %c0_i32 = arith.constant 0 : i32
    %c0_i32_0 = arith.constant 0 : i32
    return %arg0, %arg1, %c0_i32 : i32, i32, i32
  }
  func.func @transform_1(%arg0: i32, %arg1: i32) -> (i32, i32) {
    %c0_i32 = arith.constant 0 : i32
    %c0_i32_0 = arith.constant 0 : i32
    %c0_i32_1 = arith.constant 0 : i32
    return %c0_i32, %c0_i32_0 : i32, i32
  }
  func.func @transform_2(%arg0: i32, %arg1: i32) -> (i32, i32) {
    %c0_i32 = arith.constant 0 : i32
    %c0_i32_0 = arith.constant 0 : i32
    %c0_i32_1 = arith.constant 0 : i32
    return %c0_i32, %c0_i32_0 : i32, i32
  }
  func.func @transform_3(%arg0: i32, %arg1: i32) -> (i32, i32) {
    %c0_i32 = arith.constant 0 : i32
    %c0_i32_0 = arith.constant 0 : i32
    %c0_i32_1 = arith.constant 0 : i32
    return %c0_i32, %c0_i32_0 : i32, i32
  }
  func.func @transform_4(%arg0: i32, %arg1: i32) -> (i32, i32, i32, i32) {
    %c0_i32 = arith.constant 0 : i32
    %c0_i32_0 = arith.constant 0 : i32
    %c0_i32_1 = arith.constant 0 : i32
    return %arg0, %c0_i32, %arg1, %c0_i32_0 : i32, i32, i32, i32
  }
  func.func @transform_5(%arg0: i32, %arg1: i32) -> (i32, i32, i32, i32) {
    %c0_i32 = arith.constant 0 : i32
    %c0_i32_0 = arith.constant 0 : i32
    %c0_i32_1 = arith.constant 0 : i32
    return %arg0, %c0_i32, %arg1, %c0_i32_0 : i32, i32, i32, i32
  }
  func.func @transform_6(%arg0: i32, %arg1: i32) -> (i32, i32, i32, i32) {
    %c0_i32 = arith.constant 0 : i32
    %c0_i32_0 = arith.constant 0 : i32
    %c0_i32_1 = arith.constant 0 : i32
    return %arg0, %c0_i32, %arg1, %c0_i32_0 : i32, i32, i32, i32
  }
}

module attributes {stable_mosaic.version = 11 : i64} {
  func.func @_flash_attn_kernel(%arg0: i32, %arg1: i32, %arg2: i32, %arg3: memref<1x2x8x8xbf16, #tpu.memory_space<vmem>>, %arg4: memref<1x2x8x8xbf16, #tpu.memory_space<vmem>>, %arg5: memref<1x2x8x8xbf16, #tpu.memory_space<vmem>>, %arg6: memref<1x8x16xbf16, #tpu.memory_space<vmem>>, %arg7: memref<2x8x1xf32, #tpu.memory_space<vmem>>, %arg8: memref<2x8x1xf32, #tpu.memory_space<vmem>>, %arg9: memref<2x8x8xf32, #tpu.memory_space<vmem>>) attributes {dimension_semantics = [#tpu.dimension_semantics<parallel>, #tpu.dimension_semantics<parallel>, #tpu.dimension_semantics<arbitrary>], iteration_bounds = array<i64: 2, 1, 1>, scalar_prefetch = 0 : i64, scratch_operands = 3 : i64, tpu.core_type = #tpu.core_type<tc>, window_params = [{transform_indices = @transform_0, window_bounds = array<i64: 1, 2, 8, 8>}, {transform_indices = @transform_1, window_bounds = array<i64: 1, 2, 8, 8>}, {transform_indices = @transform_2, window_bounds = array<i64: 1, 2, 8, 8>}, {transform_indices = @transform_3, window_bounds = array<i64: 1, 8, 16>}]} {
    %c0_i32 = arith.constant 0 : i32
    %0 = arith.cmpi eq, %arg2, %c0_i32 : i32
    %1 = arith.extui %0 : i1 to i32
    %c0_i32_0 = arith.constant 0 : i32
    %2 = arith.cmpi ne, %1, %c0_i32_0 : i32
    scf.if %2 {
      %cst_35 = arith.constant -1.000000e+30 : f32
      %44 = vector.broadcast %cst_35 : f32 to vector<2x8x1xf32>
      %c0_36 = arith.constant 0 : index
      %c0_37 = arith.constant 0 : index
      %c0_38 = arith.constant 0 : index
      %45 = vector.load %arg7[%c0_36, %c0_37, %c0_38] : memref<2x8x1xf32, #tpu.memory_space<vmem>>, vector<2x8x1xf32>
      tpu.vector_store %arg7[%c0_36, %c0_37, %c0_38], %44 {strides = array<i32>} : memref<2x8x1xf32, #tpu.memory_space<vmem>>, vector<2x8x1xf32>,
      %cst_39 = arith.constant 0.000000e+00 : f32
      %46 = vector.broadcast %cst_39 : f32 to vector<2x8x1xf32>
      %c0_40 = arith.constant 0 : index
      %c0_41 = arith.constant 0 : index
      %c0_42 = arith.constant 0 : index
      %47 = vector.load %arg8[%c0_40, %c0_41, %c0_42] : memref<2x8x1xf32, #tpu.memory_space<vmem>>, vector<2x8x1xf32>
      tpu.vector_store %arg8[%c0_40, %c0_41, %c0_42], %46 {strides = array<i32>} : memref<2x8x1xf32, #tpu.memory_space<vmem>>, vector<2x8x1xf32>,
      %cst_43 = arith.constant 0.000000e+00 : f32
      %48 = vector.broadcast %cst_43 : f32 to vector<2x8x8xf32>
      %c0_44 = arith.constant 0 : index
      %c0_45 = arith.constant 0 : index
      %c0_46 = arith.constant 0 : index
      %49 = vector.load %arg9[%c0_44, %c0_45, %c0_46] : memref<2x8x8xf32, #tpu.memory_space<vmem>>, vector<2x8x8xf32>
      tpu.vector_store %arg9[%c0_44, %c0_45, %c0_46], %48 {strides = array<i32>} : memref<2x8x8xf32, #tpu.memory_space<vmem>>, vector<2x8x8xf32>,
    } else {
    }
    %c0 = arith.constant 0 : index
    %c0_1 = arith.constant 0 : index
    %c0_2 = arith.constant 0 : index
    %c0_3 = arith.constant 0 : index
    %3 = vector.load %arg3[%c0, %c0_1, %c0_2, %c0_3] : memref<1x2x8x8xbf16, #tpu.memory_space<vmem>>, vector<1x2x8x8xbf16>
    %4 = vector.shape_cast %3 : vector<1x2x8x8xbf16> to vector<2x8x8xbf16>
    %5 = arith.extf %4 : vector<2x8x8xbf16> to vector<2x8x8xf32>
    %cst = arith.constant 0.353553385 : f32
    %6 = vector.broadcast %cst : f32 to vector<2x8x8xf32>
    %7 = arith.mulf %5, %6 : vector<2x8x8xf32>
    %8 = arith.truncf %7 : vector<2x8x8xf32> to vector<2x8x8xbf16>
    %c0_i32_4 = arith.constant 0 : i32
    %c8_i32 = arith.constant 8 : i32
    %9 = arith.muli %c0_i32_4, %c8_i32 : i32
    %10 = tpu.assume_multiple %9, 8 : i32
    %c0_5 = arith.constant 0 : index
    %c0_6 = arith.constant 0 : index
    %11 = arith.index_cast %10 : i32 to index
    %c0_7 = arith.constant 0 : index
    %12 = vector.load %arg4[%c0_5, %c0_6, %11, %c0_7] : memref<1x2x8x8xbf16, #tpu.memory_space<vmem>>, vector<1x2x8x8xbf16>
    %13 = vector.shape_cast %12 : vector<1x2x8x8xbf16> to vector<2x8x8xbf16>
    %c0_8 = arith.constant 0 : index
    %c0_9 = arith.constant 0 : index
    %14 = arith.index_cast %10 : i32 to index
    %c0_10 = arith.constant 0 : index
    %15 = vector.load %arg5[%c0_8, %c0_9, %14, %c0_10] : memref<1x2x8x8xbf16, #tpu.memory_space<vmem>>, vector<1x2x8x8xbf16>
    %16 = vector.shape_cast %15 : vector<1x2x8x8xbf16> to vector<2x8x8xbf16>
    "tpu.trace_start"() <{level = 10 : i32, message = "hqd,hkd->hqk"}> : () -> ()
    %cst_11 = arith.constant dense<0.000000e+00> : vector<2x8x8xf32>
    %17 = tpu.matmul %8, %13, %cst_11 {dimension_numbers = #tpu.dot_dimension_numbers<[2], [2], [1], [1], [0, 0, 0, 1, 1, 1], [0], [0]>} : vector<2x8x8xbf16>, vector<2x8x8xbf16>, vector<2x8x8xf32> -> vector<2x8x8xf32>
    "tpu.trace_stop"() : () -> ()
    %c0_12 = arith.constant 0 : index
    %c0_13 = arith.constant 0 : index
    %c0_14 = arith.constant 0 : index
    %18 = vector.load %arg7[%c0_12, %c0_13, %c0_14] : memref<2x8x1xf32, #tpu.memory_space<vmem>>, vector<2x8x1xf32>
    %cst_15 = arith.constant dense<0xFF800000> : vector<2x8xf32>
    %19 = vector.multi_reduction <maximumf>, %17, %cst_15 [2] : vector<2x8x8xf32> to vector<2x8xf32>
    %20 = vector.shape_cast %19 : vector<2x8xf32> to vector<2x8x1xf32>
    %21 = arith.maximumf %18, %20 : vector<2x8x1xf32>
    %22 = arith.subf %18, %21 : vector<2x8x1xf32>
    %23 = math.exp %22 : vector<2x8x1xf32>
    %24 = vector.broadcast %21 : vector<2x8x1xf32> to vector<2x8x8xf32>
    %25 = arith.subf %17, %24 : vector<2x8x8xf32>
    %26 = math.exp %25 : vector<2x8x8xf32>
    %c0_16 = arith.constant 0 : index
    %c0_17 = arith.constant 0 : index
    %c0_18 = arith.constant 0 : index
    %27 = vector.load %arg8[%c0_16, %c0_17, %c0_18] : memref<2x8x1xf32, #tpu.memory_space<vmem>>, vector<2x8x1xf32>
    %28 = arith.mulf %23, %27 : vector<2x8x1xf32>
    %cst_19 = arith.constant dense<0.000000e+00> : vector<2x8xf32>
    %29 = vector.multi_reduction <add>, %26, %cst_19 [2] : vector<2x8x8xf32> to vector<2x8xf32>
    %30 = vector.shape_cast %29 : vector<2x8xf32> to vector<2x8x1xf32>
    %31 = arith.addf %28, %30 : vector<2x8x1xf32>
    %c0_20 = arith.constant 0 : index
    %c0_21 = arith.constant 0 : index
    %c0_22 = arith.constant 0 : index
    %32 = vector.load %arg8[%c0_20, %c0_21, %c0_22] : memref<2x8x1xf32, #tpu.memory_space<vmem>>, vector<2x8x1xf32>
    tpu.vector_store %arg8[%c0_20, %c0_21, %c0_22], %31 {strides = array<i32>} : memref<2x8x1xf32, #tpu.memory_space<vmem>>, vector<2x8x1xf32>,
    %c0_23 = arith.constant 0 : index
    %c0_24 = arith.constant 0 : index
    %c0_25 = arith.constant 0 : index
    %33 = vector.load %arg9[%c0_23, %c0_24, %c0_25] : memref<2x8x8xf32, #tpu.memory_space<vmem>>, vector<2x8x8xf32>
    %34 = vector.broadcast %23 : vector<2x8x1xf32> to vector<2x8x8xf32>
    %35 = arith.mulf %34, %33 : vector<2x8x8xf32>
    %36 = arith.truncf %26 : vector<2x8x8xf32> to vector<2x8x8xbf16>
    "tpu.trace_start"() <{level = 10 : i32, message = "hqk,hkd->hqd"}> : () -> ()
    %cst_26 = arith.constant dense<0.000000e+00> : vector<2x8x8xf32>
    %37 = tpu.matmul %36, %16, %cst_26 {dimension_numbers = #tpu.dot_dimension_numbers<[2], [1], [1], [2], [0, 0, 0, 1, 1, 2], [0], [0]>} : vector<2x8x8xbf16>, vector<2x8x8xbf16>, vector<2x8x8xf32> -> vector<2x8x8xf32>
    "tpu.trace_stop"() : () -> ()
    %38 = arith.addf %35, %37 : vector<2x8x8xf32>
    %c0_27 = arith.constant 0 : index
    %c0_28 = arith.constant 0 : index
    %c0_29 = arith.constant 0 : index
    %39 = vector.load %arg9[%c0_27, %c0_28, %c0_29] : memref<2x8x8xf32, #tpu.memory_space<vmem>>, vector<2x8x8xf32>
    tpu.vector_store %arg9[%c0_27, %c0_28, %c0_29], %38 {strides = array<i32>} : memref<2x8x8xf32, #tpu.memory_space<vmem>>, vector<2x8x8xf32>,
    %c0_30 = arith.constant 0 : index
    %c0_31 = arith.constant 0 : index
    %c0_32 = arith.constant 0 : index
    %40 = vector.load %arg7[%c0_30, %c0_31, %c0_32] : memref<2x8x1xf32, #tpu.memory_space<vmem>>, vector<2x8x1xf32>
    tpu.vector_store %arg7[%c0_30, %c0_31, %c0_32], %21 {strides = array<i32>} : memref<2x8x1xf32, #tpu.memory_space<vmem>>, vector<2x8x1xf32>,
    %c1_i32 = arith.constant 1 : i32
    %c0_i32_33 = arith.constant 0 : i32
    %41 = arith.cmpi eq, %arg2, %c0_i32_33 : i32
    %42 = arith.extui %41 : i1 to i32
    %c0_i32_34 = arith.constant 0 : i32
    %43 = arith.cmpi ne, %42, %c0_i32_34 : i32
    scf.if %43 {
      %c0_35 = arith.constant 0 : index
      %c0_36 = arith.constant 0 : index
      %c0_37 = arith.constant 0 : index
      %44 = vector.load %arg9[%c0_35, %c0_36, %c0_37] : memref<2x8x8xf32, #tpu.memory_space<vmem>>, vector<2x8x8xf32>
      %c0_38 = arith.constant 0 : index
      %c0_39 = arith.constant 0 : index
      %c0_40 = arith.constant 0 : index
      %45 = vector.load %arg8[%c0_38, %c0_39, %c0_40] : memref<2x8x1xf32, #tpu.memory_space<vmem>>, vector<2x8x1xf32>
      %46 = tpu.reciprocal %45 {approx = true} : vector<2x8x1xf32> -> vector<2x8x1xf32>
      %47 = vector.broadcast %46 : vector<2x8x1xf32> to vector<2x8x8xf32>
      %48 = arith.mulf %44, %47 : vector<2x8x8xf32>
      %49 = vector.extract_strided_slice %48 {offsets = [0, 0, 0], sizes = [1, 8, 8], strides = [1, 1, 1]} : vector<2x8x8xf32> to vector<1x8x8xf32>
      %50 = vector.shape_cast %49 : vector<1x8x8xf32> to vector<8x8xf32>
      %51 = vector.extract_strided_slice %48 {offsets = [1, 0, 0], sizes = [1, 8, 8], strides = [1, 1, 1]} : vector<2x8x8xf32> to vector<1x8x8xf32>
      %52 = vector.shape_cast %51 : vector<1x8x8xf32> to vector<8x8xf32>
      %53 = tpu.concatenate %50, %52 in 1 : vector<8x8xf32>, vector<8x8xf32> -> vector<8x16xf32>
      %54 = arith.truncf %53 : vector<8x16xf32> to vector<8x16xbf16>
      %c0_41 = arith.constant 0 : index
      %c0_42 = arith.constant 0 : index
      %c0_43 = arith.constant 0 : index
      %55 = vector.load %arg6[%c0_41, %c0_42, %c0_43] : memref<1x8x16xbf16, #tpu.memory_space<vmem>>, vector<1x8x16xbf16>
      %56 = vector.shape_cast %55 : vector<1x8x16xbf16> to vector<8x16xbf16>
      %57 = vector.shape_cast %54 : vector<8x16xbf16> to vector<1x8x16xbf16>
      tpu.vector_store %arg6[%c0_41, %c0_42, %c0_43], %57 {strides = array<i32>} : memref<1x8x16xbf16, #tpu.memory_space<vmem>>, vector<1x8x16xbf16>,
    } else {
    }
    return
  }
  func.func @transform_0(%arg0: i32, %arg1: i32, %arg2: i32) -> (i32, i32, i32, i32) {
    %c0_i32 = arith.constant 0 : i32
    %c0_i32_0 = arith.constant 0 : i32
    %c0_i32_1 = arith.constant 0 : i32
    return %arg0, %c0_i32, %arg1, %c0_i32_0 : i32, i32, i32, i32
  }
  func.func @transform_1(%arg0: i32, %arg1: i32, %arg2: i32) -> (i32, i32, i32, i32) {
    %c0_i32 = arith.constant 0 : i32
    %c0_i32_0 = arith.constant 0 : i32
    %c0_i32_1 = arith.constant 0 : i32
    return %arg0, %c0_i32, %arg2, %c0_i32_0 : i32, i32, i32, i32
  }
  func.func @transform_2(%arg0: i32, %arg1: i32, %arg2: i32) -> (i32, i32, i32, i32) {
    %c0_i32 = arith.constant 0 : i32
    %c0_i32_0 = arith.constant 0 : i32
    %c0_i32_1 = arith.constant 0 : i32
    return %arg0, %c0_i32, %arg2, %c0_i32_0 : i32, i32, i32, i32
  }
  func.func @transform_3(%arg0: i32, %arg1: i32, %arg2: i32) -> (i32, i32, i32) {
    %c0_i32 = arith.constant 0 : i32
    %c0_i32_0 = arith.constant 0 : i32
    return %arg0, %arg1, %c0_i32 : i32, i32, i32
  }
}

module attributes {stable_mosaic.version = 11 : i64} {
  func.func @_linear_kernel(%arg0: i32, %arg1: memref<16x16xbf16, #tpu.memory_space<vmem>>, %arg2: memref<16x16xbf16, #tpu.memory_space<vmem>>, %arg3: memref<1x16xf32, #tpu.memory_space<vmem>>, %arg4: memref<16x16xf32, #tpu.memory_space<vmem>>) attributes {dimension_semantics = [#tpu.dimension_semantics<parallel>], iteration_bounds = array<i64: 1>, scalar_prefetch = 0 : i64, scratch_operands = 0 : i64, tpu.core_type = #tpu.core_type<tc>, window_params = [{transform_indices = @transform_0, window_bounds = array<i64: 16, 16>}, {pipeline_mode = #tpu.pipeline_mode<synchronous>, transform_indices = @transform_1, window_bounds = array<i64: 16, 16>}, {pipeline_mode = #tpu.pipeline_mode<synchronous>, transform_indices = @transform_2, window_bounds = array<i64: 1, 16>}, {transform_indices = @transform_3, window_bounds = array<i64: 16, 16>}]} {
    %c0 = arith.constant 0 : index
    %c0_0 = arith.constant 0 : index
    %0 = vector.load %arg1[%c0, %c0_0] : memref<16x16xbf16, #tpu.memory_space<vmem>>, vector<16x16xbf16>
    %c0_1 = arith.constant 0 : index
    %c0_2 = arith.constant 0 : index
    %1 = vector.load %arg2[%c0_1, %c0_2] : memref<16x16xbf16, #tpu.memory_space<vmem>>, vector<16x16xbf16>
    %cst = arith.constant dense<0.000000e+00> : vector<16x16xf32>
    %2 = tpu.matmul %0, %1, %cst {dimension_numbers = #tpu.dot_dimension_numbers<[1], [0], [0], [1], [0, 0, 1, 1], [], []>} : vector<16x16xbf16>, vector<16x16xbf16>, vector<16x16xf32> -> vector<16x16xf32>
    %c0_3 = arith.constant 0 : index
    %c0_4 = arith.constant 0 : index
    %3 = vector.load %arg3[%c0_3, %c0_4] : memref<1x16xf32, #tpu.memory_space<vmem>>, vector<1x16xf32>
    %4 = vector.broadcast %3 : vector<1x16xf32> to vector<16x16xf32>
    %5 = arith.addf %2, %4 : vector<16x16xf32>
    %c0_5 = arith.constant 0 : index
    %c0_6 = arith.constant 0 : index
    %6 = vector.load %arg4[%c0_5, %c0_6] : memref<16x16xf32, #tpu.memory_space<vmem>>, vector<16x16xf32>
    tpu.vector_store %arg4[%c0_5, %c0_6], %5 {strides = array<i32>} : memref<16x16xf32, #tpu.memory_space<vmem>>, vector<16x16xf32>,
    return
  }
  func.func @transform_0(%arg0: i32) -> (i32, i32) {
    %c0_i32 = arith.constant 0 : i32
    %c0_i32_0 = arith.constant 0 : i32
    return %arg0, %c0_i32 : i32, i32
  }
  func.func @transform_1(%arg0: i32) -> (i32, i32) {
    %c0_i32 = arith.constant 0 : i32
    %c0_i32_0 = arith.constant 0 : i32
    %c0_i32_1 = arith.constant 0 : i32
    return %c0_i32, %c0_i32_0 : i32, i32
  }
  func.func @transform_2(%arg0: i32) -> (i32, i32) {
    %c0_i32 = arith.constant 0 : i32
    %c0_i32_0 = arith.constant 0 : i32
    %c0_i32_1 = arith.constant 0 : i32
    return %c0_i32, %c0_i32_0 : i32, i32
  }
  func.func @transform_3(%arg0: i32) -> (i32, i32) {
    %c0_i32 = arith.constant 0 : i32
    %c0_i32_0 = arith.constant 0 : i32
    return %arg0, %c0_i32 : i32, i32
  }
}

</mosaic_0001>

<llo_original>
// kernel: attention_forward.3
$region0: #{attention_forward.3}
  #allocation0 [shape = 'u32[]', space=smem, size = 0x4, offset = 0x4, fixed_abs, tag = 'smem constant byte address 0x4 - core index']
  #allocation1 [shape = 'u32[144,128]{1,0:T(1,128)}', space=vmem, size = 0x12000, scoped, tag = 'internal scratch']
  %s0 = inlined_call_operand.vmem [shape: f32[2,8,16], index: 0, kind: input, shape index: {}]
  %s1 = inlined_call_operand.vmem [shape: bf16[16,16], index: 1, kind: input, shape index: {}]
  %s2 = inlined_call_operand.vmem [shape: bf16[16,16], index: 2, kind: input, shape index: {}]
  %s3 = inlined_call_operand.vmem [shape: bf16[16,16], index: 3, kind: input, shape index: {}]
  %s4 = inlined_call_operand.vmem [shape: bf16[2,2,8,8], index: 4, kind: output, shape index: {0}]
  %s5 = inlined_call_operand.vmem [shape: bf16[2,2,8,8], index: 5, kind: output, shape index: {1}]
  %s6 = inlined_call_operand.vmem [shape: bf16[2,2,8,8], index: 6, kind: output, shape index: {2}]
  %7 = xla_tuple %s4, %s5, %s6
  %s8 = sld [smem:[#allocation0]]
  $region65: #{attention_forward.3} parent=0
    _
  %s10 = ssub.s32 1, %s8
  %s11 = scalar_select 0, %s10, %s8
  loop: start=0, step=1, limit=4
  $region2: #{attention_forward.3} parent=0 // loop_pre_header
    _
  $region3: #{attention_forward.3} parent=0 // loop_header
    %s13 = sphi 0, %s17
    %p14 = scmp.ge.s32.totalorder %s13, 4
    %s20 = sphi 0, %s32
    %s21 = sphi 0, %s28
    %s22 = sphi 0, %s20
    %s23 = sphi 0, %s21
    %s24 = sphi 0, %s22
    %s25 = sphi 0, %s23
    %s37 = sphi 0, %s39
    %s40 = sphi 0, %s37
    %s41 = sphi 0, %s40
    %s57 = sphi 0, %s41
    %s61 = sphi 0, %s61
    %s63 = sphi 0, %s61
    %s64 = sphi 0, %s63
    %s78 = sphi 0, %s64
    %s82 = sphi 0, %s82
    %s84 = sphi 0, %s82
    %s85 = sphi 0, %s84
    %s99 = sphi 0, %s85
    %s103 = sphi 0, %s103
    %s105 = sphi 0, %s103
    %s106 = sphi 0, %s105
    %s120 = sphi 0, %s106
    %s128 = sphi 0, %s130
    %s131 = sphi 0, %s128
    %s132 = sphi 0, %s131
    %s148 = sphi 0, %s132
    %s156 = sphi 0, %s158
    %s159 = sphi 0, %s156
    %s160 = sphi 0, %s159
    %s176 = sphi 0, %s160
    %s184 = sphi 0, %s186
    %s187 = sphi 0, %s184
    %s188 = sphi 0, %s187
    %s204 = sphi 0, %s188
  $region4: #{attention_forward.3} parent=0 // loop_header_branch
    %16 = sbr.rel (%p14) target = $region8
  $region5: #{attention_forward.3} parent=0 // loop_body
    %s18 = ssub.s32 %s13, 1
    %s19 = ssub.s32 %s13, 2
    %s26 = sadd.s32 1, %s21
    %p27 = scmp.ge.s32.totalorder %s26, 1
    %s28 = scalar_select %p27, 0, %s26
    %s29 = sadd.s32 1, %s20
    %s30 = scalar_select %p27, %s29, %s20
    %p31 = scmp.ge.s32.totalorder %s30, 2
    %s32 = scalar_select %p31, 0, %s30
    %s33 = ssub.s32 %s20, %s32
    %s34 = ssub.s32 %s21, %s28
    %s35 = sor.u32 %s33, %s34
    %p36 = scmp.eq.s32.totalorder %s35, 0
    %s38 = sadd.s32 %s37, 1
    %s39 = scalar_select %p36, %s37, %s38
    %p42 = pneg %p36
    %p43 = scmp.eq.s32.totalorder %s13, 1
    %p44 = por %p42, %p43
    %p45 = scmp.ne.s32.totalorder %s37, %s40
    %p46 = scmp.eq.s32.totalorder %s13, 0
    %p47 = por %p45, %p46
    %p48 = scmp.ne.s32.totalorder %s37, %s40
    %p49 = scmp.eq.s32.totalorder %s18, 1
    %p50 = por %p48, %p49
    %p51 = scmp.ne.s32.totalorder %s40, %s41
    %p52 = scmp.eq.s32.totalorder %s18, 0
    %p53 = por %p51, %p52
    %p54 = scmp.ne.s32.totalorder %s40, %s41
    %p55 = scmp.eq.s32.totalorder %s19, 1
    %p56 = por %p54, %p55
    %p58 = scmp.ne.s32.totalorder %s41, %s57
    %p59 = scmp.eq.s32.totalorder %s19, 0
    %p60 = por %p58, %p59
    %s62 = sadd.s32 %s61, 1
    %p65 = scmp.eq.s32.totalorder %s13, 1
    %p66 = scmp.ne.s32.totalorder %s61, %s63
    %p67 = scmp.eq.s32.totalorder %s13, 0
    %p68 = por %p66, %p67
    %p69 = scmp.ne.s32.totalorder %s61, %s63
    %p70 = scmp.eq.s32.totalorder %s18, 1
    %p71 = por %p69, %p70
    %p72 = scmp.ne.s32.totalorder %s63, %s64
    %p73 = scmp.eq.s32.totalorder %s18, 0
    %p74 = por %p72, %p73
    %p75 = scmp.ne.s32.totalorder %s63, %s64
    %p76 = scmp.eq.s32.totalorder %s19, 1
    %p77 = por %p75, %p76
    %p79 = scmp.ne.s32.totalorder %s64, %s78
    %p80 = scmp.eq.s32.totalorder %s19, 0
    %p81 = por %p79, %p80
    %s83 = sadd.s32 %s82, 1
    %p86 = scmp.eq.s32.totalorder %s13, 1
    %p87 = scmp.ne.s32.totalorder %s82, %s84
    %p88 = scmp.eq.s32.totalorder %s13, 0
    %p89 = por %p87, %p88
    %p90 = scmp.ne.s32.totalorder %s82, %s84
    %p91 = scmp.eq.s32.totalorder %s18, 1
    %p92 = por %p90, %p91
    %p93 = scmp.ne.s32.totalorder %s84, %s85
    %p94 = scmp.eq.s32.totalorder %s18, 0
    %p95 = por %p93, %p94
    %p96 = scmp.ne.s32.totalorder %s84, %s85
    %p97 = scmp.eq.s32.totalorder %s19, 1
    %p98 = por %p96, %p97
    %p100 = scmp.ne.s32.totalorder %s85, %s99
    %p101 = scmp.eq.s32.totalorder %s19, 0
    %p102 = por %p100, %p101
    %s104 = sadd.s32 %s103, 1
    %p107 = scmp.eq.s32.totalorder %s13, 1
    %p108 = scmp.ne.s32.totalorder %s103, %s105
    %p109 = scmp.eq.s32.totalorder %s13, 0
    %p110 = por %p108, %p109
    %p111 = scmp.ne.s32.totalorder %s103, %s105
    %p112 = scmp.eq.s32.totalorder %s18, 1
    %p113 = por %p111, %p112
    %p114 = scmp.ne.s32.totalorder %s105, %s106
    %p115 = scmp.eq.s32.totalorder %s18, 0
    %p116 = por %p114, %p115
    %p117 = scmp.ne.s32.totalorder %s105, %s106
    %p118 = scmp.eq.s32.totalorder %s19, 1
    %p119 = por %p117, %p118
    %p121 = scmp.ne.s32.totalorder %s106, %s120
    %p122 = scmp.eq.s32.totalorder %s19, 0
    %p123 = por %p121, %p122
    %s124 = ssub.s32 %s20, %s32
    %s125 = ssub.s32 %s21, %s28
    %s126 = sor.u32 %s124, %s125
    %p127 = scmp.eq.s32.totalorder %s126, 0
    %s129 = sadd.s32 %s128, 1
    %s130 = scalar_select %p127, %s128, %s129
    %p133 = pneg %p127
    %p134 = scmp.eq.s32.totalorder %s13, 1
    %p135 = por %p133, %p134
    %p136 = scmp.ne.s32.totalorder %s128, %s131
    %p137 = scmp.eq.s32.totalorder %s13, 0
    %p138 = por %p136, %p137
    %p139 = scmp.ne.s32.totalorder %s128, %s131
    %p140 = scmp.eq.s32.totalorder %s18, 1
    %p141 = por %p139, %p140
    %p142 = scmp.ne.s32.totalorder %s131, %s132
    %p143 = scmp.eq.s32.totalorder %s18, 0
    %p144 = por %p142, %p143
    %p145 = scmp.ne.s32.totalorder %s131, %s132
    %p146 = scmp.eq.s32.totalorder %s19, 1
    %p147 = por %p145, %p146
    %p149 = scmp.ne.s32.totalorder %s132, %s148
    %p150 = scmp.eq.s32.totalorder %s19, 0
    %p151 = por %p149, %p150
    %s152 = ssub.s32 %s20, %s32
    %s153 = ssub.s32 %s21, %s28
    %s154 = sor.u32 %s152, %s153
    %p155 = scmp.eq.s32.totalorder %s154, 0
    %s157 = sadd.s32 %s156, 1
    %s158 = scalar_select %p155, %s156, %s157
    %p161 = pneg %p155
    %p162 = scmp.eq.s32.totalorder %s13, 1
    %p163 = por %p161, %p162
    %p164 = scmp.ne.s32.totalorder %s156, %s159
    %p165 = scmp.eq.s32.totalorder %s13, 0
    %p166 = por %p164, %p165
    %p167 = scmp.ne.s32.totalorder %s156, %s159
    %p168 = scmp.eq.s32.totalorder %s18, 1
    %p169 = por %p167, %p168
    %p170 = scmp.ne.s32.totalorder %s159, %s160
    %p171 = scmp.eq.s32.totalorder %s18, 0
    %p172 = por %p170, %p171
    %p173 = scmp.ne.s32.totalorder %s159, %s160
    %p174 = scmp.eq.s32.totalorder %s19, 1
    %p175 = por %p173, %p174
    %p177 = scmp.ne.s32.totalorder %s160, %s176
    %p178 = scmp.eq.s32.totalorder %s19, 0
    %p179 = por %p177, %p178
    %s180 = ssub.s32 %s20, %s32
    %s181 = ssub.s32 %s21, %s28
    %s182 = sor.u32 %s180, %s181
    %p183 = scmp.eq.s32.totalorder %s182, 0
    %s185 = sadd.s32 %s184, 1
    %s186 = scalar_select %p183, %s184, %s185
    %p189 = pneg %p183
    %p190 = scmp.eq.s32.totalorder %s13, 1
    %p191 = por %p189, %p190
    %p192 = scmp.ne.s32.totalorder %s184, %s187
    %p193 = scmp.eq.s32.totalorder %s13, 0
    %p194 = por %p192, %p193
    %p195 = scmp.ne.s32.totalorder %s184, %s187
    %p196 = scmp.eq.s32.totalorder %s18, 1
    %p197 = por %p195, %p196
    %p198 = scmp.ne.s32.totalorder %s187, %s188
    %p199 = scmp.eq.s32.totalorder %s18, 0
    %p200 = por %p198, %p199
    %p201 = scmp.ne.s32.totalorder %s187, %s188
    %p202 = scmp.eq.s32.totalorder %s19, 1
    %p203 = por %p201, %p202
    %p205 = scmp.ne.s32.totalorder %s188, %s204
    %p206 = scmp.eq.s32.totalorder %s19, 0
    %p207 = por %p205, %p206
    %p208 = scmp.le.s32.totalorder 1, %s13
    %p209 = scmp.lt.s32.totalorder %s13, 3
    %p210 = pnand %p208, %p209
    %p211 = pneg %p210
    // Predicated region
    $region9: #{attention_forward.3} parent=5 // pred_check
      _
    $region10: #{attention_forward.3} parent=5 // pred_check_branch
      %213 = sbr.rel (%p210) target = $region12
    $region11: #{attention_forward.3} parent=5 // pred_region
      %s214 = ssub.s32 %s13, 1
      // Predicated region
      $region13: #{attention_forward.3} parent=11 // pred_check
        %p215 = pneg %p74
      $region14: #{attention_forward.3} parent=11 // pred_check_branch
        %217 = sbr.rel (%p215) target = $region16
      $region15: #{attention_forward.3} parent=11 // pred_region
        _
      $region16: #{attention_forward.3} parent=11 // pred_fallthru
        _
      // Predicated region
      $region17: #{attention_forward.3} parent=11 // pred_check
        %p218 = pneg %p95
      $region18: #{attention_forward.3} parent=11 // pred_check_branch
        %220 = sbr.rel (%p218) target = $region20
      $region19: #{attention_forward.3} parent=11 // pred_region
        _
      $region20: #{attention_forward.3} parent=11 // pred_fallthru
        _
      // Predicated region
      $region21: #{attention_forward.3} parent=11 // pred_check
        %p221 = pneg %p116
      $region22: #{attention_forward.3} parent=11 // pred_check_branch
        %223 = sbr.rel (%p221) target = $region24
      $region23: #{attention_forward.3} parent=11 // pred_region
        _
      $region24: #{attention_forward.3} parent=11 // pred_fallthru
        _
    $region12: #{attention_forward.3} parent=5 // pred_fallthru
      _
    %p224 = scmp.lt.s32.totalorder %s13, 2
    // Predicated region
    $region25: #{attention_forward.3} parent=5 // pred_check
      %p225 = pneg %p224
    $region26: #{attention_forward.3} parent=5 // pred_check_branch
      %227 = sbr.rel (%p225) target = $region28
    $region27: #{attention_forward.3} parent=5 // pred_region
      // Predicated region
      $region29: #{attention_forward.3} parent=27 // pred_check
        %p228 = pneg %p47
      $region30: #{attention_forward.3} parent=27 // pred_check_branch
        %230 = sbr.rel (%p228) target = $region32
      $region31: #{attention_forward.3} parent=27 // pred_region
        %p231 = scmp.lt.s32.totalorder %s20, 1
        %s232 = scalar_select %p231, %s20, 1
        %p233 = scmp.lt.s32.totalorder %s21, 0
        %s234 = scalar_select %p233, %s21, 0
        %s235 = sadd.s32 %s234, %s232
        %s236 = smul.addr %s235, 8
        %s237 = scalar_lea.vmem %s0, %s236
      $region32: #{attention_forward.3} parent=27 // pred_fallthru
        _
    $region28: #{attention_forward.3} parent=5 // pred_fallthru
      _
    %p238 = scmp.le.s32.totalorder 1, %s13
    %p239 = scmp.lt.s32.totalorder %s13, 3
    %p240 = pnand %p238, %p239
    %p241 = pneg %p240
    // Predicated region
    $region33: #{attention_forward.3} parent=5 // pred_check
      _
    $region34: #{attention_forward.3} parent=5 // pred_check_branch
      %243 = sbr.rel (%p240) target = $region36
    $region35: #{attention_forward.3} parent=5 // pred_region
      %s244 = ssub.s32 %s13, 1
      %p245 = scmp.lt.s32.totalorder %s22, 1
      %s246 = scalar_select %p245, %s22, 1
      %p247 = scmp.lt.s32.totalorder %s23, 0
      %s248 = scalar_select %p247, %s23, 0
      %s249 = sadd.s32 %s248, %s246
      %s250 = smul.addr %s249, 8
      %s251 = scalar_lea.vmem %s0, %s250
      %p252 = pneg %p53
      %p253 = pneg %p50
      %p254 = pneg %p74
      %p255 = pneg %p71
      %p256 = pneg %p95
      %p257 = pneg %p92
      %p258 = pneg %p116
      %p259 = pneg %p113
      %p260 = pneg %p144
      %p261 = pneg %p141
      %p262 = scmp.lt.s32.totalorder %s22, 1
      %s263 = scalar_select %p262, %s22, 1
      %p264 = scmp.lt.s32.totalorder %s23, 0
      %s265 = scalar_select %p264, %s23, 0
      %s266 = smul.addr %s263, 2
      %s267 = sadd.s32 %s265, %s266
      %s268 = smul.addr %s267, 4
      %s269 = scalar_lea.vmem %s4, %s268
      %p270 = pneg %p172
      %p271 = pneg %p169
      %p272 = scmp.lt.s32.totalorder %s22, 1
      %s273 = scalar_select %p272, %s22, 1
      %p274 = scmp.lt.s32.totalorder %s23, 0
      %s275 = scalar_select %p274, %s23, 0
      %s276 = smul.addr %s273, 2
      %s277 = sadd.s32 %s275, %s276
      %s278 = smul.addr %s277, 4
      %s279 = scalar_lea.vmem %s5, %s278
      %p280 = pneg %p200
      %p281 = pneg %p197
      %p282 = scmp.lt.s32.totalorder %s22, 1
      %s283 = scalar_select %p282, %s22, 1
      %p284 = scmp.lt.s32.totalorder %s23, 0
      %s285 = scalar_select %p284, %s23, 0
      %s286 = smul.addr %s283, 2
      %s287 = sadd.s32 %s285, %s286
      %s288 = smul.addr %s287, 4
      %s289 = scalar_lea.vmem %s6, %s288
      %p290 = scmp.lt.s32.totalorder %s22, 1
      %s291 = scalar_select %p290, %s22, 1
      %p292 = scmp.lt.s32.totalorder %s23, 0
      %s293 = scalar_select %p292, %s23, 0
      %s294 = sadd.s32 %s293, %s291
      %s295 = smul.addr %s294, 8
      %s296 = scalar_lea.vmem %s0, %s295
      %p297 = scmp.lt.s32.totalorder %s22, 1
      %s298 = scalar_select %p297, %s22, 1
      %p299 = scmp.lt.s32.totalorder %s23, 0
      %s300 = scalar_select %p299, %s23, 0
      %s301 = smul.addr %s298, 2
      %s302 = sadd.s32 %s300, %s301
      %s303 = smul.addr %s302, 4
      %s304 = scalar_lea.vmem %s4, %s303
      %p305 = scmp.lt.s32.totalorder %s22, 1
      %s306 = scalar_select %p305, %s22, 1
      %p307 = scmp.lt.s32.totalorder %s23, 0
      %s308 = scalar_select %p307, %s23, 0
      %s309 = smul.addr %s306, 2
      %s310 = sadd.s32 %s308, %s309
      %s311 = smul.addr %s310, 4
      %s312 = scalar_lea.vmem %s5, %s311
      %p313 = scmp.lt.s32.totalorder %s22, 1
      %s314 = scalar_select %p313, %s22, 1
      %p315 = scmp.lt.s32.totalorder %s23, 0
      %s316 = scalar_select %p315, %s23, 0
      %s317 = smul.addr %s314, 2
      %s318 = sadd.s32 %s316, %s317
      %s319 = smul.addr %s318, 4
      %s320 = scalar_lea.vmem %s6, %s319
      %v322 = vld [vmem:[%s296] sm:$0xff]
      %v323 = vpack.c.bf16 %v322, %v322
      %v324 = vld [vmem:[%s1] sm:$0xf]
      %v325 = vld [vmem:[%s1 + $0x4] sm:$0xf]
      %v328 = vunpack.c.l.b16 %v324
      %v329 = vunpack.c.l.b16 %v325
      %v330 = vpack.c.b16 %v329, %v328
      %vm332 = vcmask 130048
      %v334 = vsel %vm332, %v323, 0
      %336 = vmatprep.subr.bf16.mxu0 0
      %337 = vmatpush1.bf16.msra.mxu0 %v330
      %338 = vmatprep.subr.bf16.mxu0 0
      %339 = vmatpush1.bf16.msra.mxu0 0
      %340 = vmatprep.subr.bf16.mxu0 0
      %341 = vmatpush1.bf16.msra.mxu0 0
      %342 = vmatprep.subr.bf16.mxu0 0
      %343 = vmatpush1.bf16.msra.mxu0 0
      %344 = vmatprep.subr.bf16.mxu0 0
      %345 = vmatpush1.bf16.msra.mxu0 0
      %346 = vmatprep.subr.bf16.mxu0 0
      %347 = vmatpush1.bf16.msra.mxu0 0
      %348 = vmatprep.subr.bf16.mxu0 0
      %349 = vmatpush1.bf16.msra.mxu0 0
      %350 = vmatprep.subr.bf16.mxu0 0
      %351 = vmatpush1.bf16.msra.mxu0 0
      %352 = vmatprep.subr.bf16.mxu0 0
      %353 = vmatpush1.bf16.msra.mxu0 0
      %354 = vmatprep.subr.bf16.mxu0 0
      %355 = vmatpush1.bf16.msra.mxu0 0
      %356 = vmatprep.subr.bf16.mxu0 0
      %357 = vmatpush1.bf16.msra.mxu0 0
      %358 = vmatprep.subr.bf16.mxu0 0
      %359 = vmatpush1.bf16.msra.mxu0 0
      %360 = vmatprep.subr.bf16.mxu0 0
      %361 = vmatpush1.bf16.msra.mxu0 0
      %362 = vmatprep.subr.bf16.mxu0 0
      %363 = vmatpush1.bf16.msra.mxu0 0
      %364 = vmatprep.subr.bf16.mxu0 0
      %365 = vmatpush1.bf16.msra.mxu0 0
      %366 = vmatprep.subr.bf16.mxu0 0
      %367 = vmatpush1.bf16.msra.mxu0 0
      %368 = vmatprep.mubr.bf16.mxu0 0
      %369 = vmatmul.mubr.bf16.gmra.mrb[0].mxu0 %v334
      %v370 = vpop.f32.mrb[0].mxu0
      %v371 = vadd.f32 0.0, %v370
      %v372 = vpop.f32.mrb[0].mxu0
      %v373 = vpop.f32.mrb[0].mxu0
      %v374 = vpop.f32.mrb[0].mxu0
      %375 = vdwg.mxu0
      %v376 = vpack.c.bf16 %v371, %v371
      %vm377 = vcmask 60416
      %378 = vst.msk [vmem:[%s304] sm:$0xf] %vm377, %v376
      %v380 = vunpack.c.l.b16 %v376
      %v381 = vpack.c.b16 %v380, %v380
      %382 = vrot.lane.b32.xlu0 %v381, 120
      %v383 = vpop.permute.xlu0 %382
      %s385 = scalar_lea.vmem %s304, 4
      %386 = vst.msk [vmem:[%s385] sm:$0xf] %vm377, %v383
      %v387 = vld [vmem:[%s2] sm:$0xf]
      %v388 = vld [vmem:[%s2 + $0x4] sm:$0xf]
      %v391 = vunpack.c.l.b16 %v387
      %v392 = vunpack.c.l.b16 %v388
      %v393 = vpack.c.b16 %v392, %v391
      %395 = vmatprep.subr.bf16.mxu0 0
      %396 = vmatpush1.bf16.msra.mxu0 %v393
      %397 = vmatprep.subr.bf16.mxu0 0
      %398 = vmatpush1.bf16.msra.mxu0 0
      %399 = vmatprep.subr.bf16.mxu0 0
      %400 = vmatpush1.bf16.msra.mxu0 0
      %401 = vmatprep.subr.bf16.mxu0 0
      %402 = vmatpush1.bf16.msra.mxu0 0
      %403 = vmatprep.subr.bf16.mxu0 0
      %404 = vmatpush1.bf16.msra.mxu0 0
      %405 = vmatprep.subr.bf16.mxu0 0
      %406 = vmatpush1.bf16.msra.mxu0 0
      %407 = vmatprep.subr.bf16.mxu0 0
      %408 = vmatpush1.bf16.msra.mxu0 0
      %409 = vmatprep.subr.bf16.mxu0 0
      %410 = vmatpush1.bf16.msra.mxu0 0
      %411 = vmatprep.subr.bf16.mxu0 0
      %412 = vmatpush1.bf16.msra.mxu0 0
      %413 = vmatprep.subr.bf16.mxu0 0
      %414 = vmatpush1.bf16.msra.mxu0 0
      %415 = vmatprep.subr.bf16.mxu0 0
      %416 = vmatpush1.bf16.msra.mxu0 0
      %417 = vmatprep.subr.bf16.mxu0 0
      %418 = vmatpush1.bf16.msra.mxu0 0
      %419 = vmatprep.subr.bf16.mxu0 0
      %420 = vmatpush1.bf16.msra.mxu0 0
      %421 = vmatprep.subr.bf16.mxu0 0
      %422 = vmatpush1.bf16.msra.mxu0 0
      %423 = vmatprep.subr.bf16.mxu0 0
      %424 = vmatpush1.bf16.msra.mxu0 0
      %425 = vmatprep.subr.bf16.mxu0 0
      %426 = vmatpush1.bf16.msra.mxu0 0
      %427 = vmatprep.mubr.bf16.mxu0 0
      %428 = vmatmul.mubr.bf16.gmra.mrb[0].mxu0 %v334
      %v429 = vpop.f32.mrb[0].mxu0
      %v430 = vadd.f32 0.0, %v429
      %v431 = vpop.f32.mrb[0].mxu0
      %v432 = vpop.f32.mrb[0].mxu0
      %v433 = vpop.f32.mrb[0].mxu0
      %434 = vdwg.mxu0
      %v435 = vpack.c.bf16 %v430, %v430
      %436 = vst.msk [vmem:[%s312] sm:$0xf] %vm377, %v435
      %v438 = vunpack.c.l.b16 %v435
      %v439 = vpack.c.b16 %v438, %v438
      %440 = vrot.lane.b32.xlu0 %v439, 120
      %v441 = vpop.permute.xlu0 %440
      %s443 = scalar_lea.vmem %s312, 4
      %444 = vst.msk [vmem:[%s443] sm:$0xf] %vm377, %v441
      %v445 = vld [vmem:[%s3] sm:$0xf]
      %v446 = vld [vmem:[%s3 + $0x4] sm:$0xf]
      %v449 = vunpack.c.l.b16 %v445
      %v450 = vunpack.c.l.b16 %v446
      %v451 = vpack.c.b16 %v450, %v449
      %453 = vmatprep.subr.bf16.mxu0 0
      %454 = vmatpush1.bf16.msra.mxu0 %v451
      %455 = vmatprep.subr.bf16.mxu0 0
      %456 = vmatpush1.bf16.msra.mxu0 0
      %457 = vmatprep.subr.bf16.mxu0 0
      %458 = vmatpush1.bf16.msra.mxu0 0
      %459 = vmatprep.subr.bf16.mxu0 0
      %460 = vmatpush1.bf16.msra.mxu0 0
      %461 = vmatprep.subr.bf16.mxu0 0
      %462 = vmatpush1.bf16.msra.mxu0 0
      %463 = vmatprep.subr.bf16.mxu0 0
      %464 = vmatpush1.bf16.msra.mxu0 0
      %465 = vmatprep.subr.bf16.mxu0 0
      %466 = vmatpush1.bf16.msra.mxu0 0
      %467 = vmatprep.subr.bf16.mxu0 0
      %468 = vmatpush1.bf16.msra.mxu0 0
      %469 = vmatprep.subr.bf16.mxu0 0
      %470 = vmatpush1.bf16.msra.mxu0 0
      %471 = vmatprep.subr.bf16.mxu0 0
      %472 = vmatpush1.bf16.msra.mxu0 0
      %473 = vmatprep.subr.bf16.mxu0 0
      %474 = vmatpush1.bf16.msra.mxu0 0
      %475 = vmatprep.subr.bf16.mxu0 0
      %476 = vmatpush1.bf16.msra.mxu0 0
      %477 = vmatprep.subr.bf16.mxu0 0
      %478 = vmatpush1.bf16.msra.mxu0 0
      %479 = vmatprep.subr.bf16.mxu0 0
      %480 = vmatpush1.bf16.msra.mxu0 0
      %481 = vmatprep.subr.bf16.mxu0 0
      %482 = vmatpush1.bf16.msra.mxu0 0
      %483 = vmatprep.subr.bf16.mxu0 0
      %484 = vmatpush1.bf16.msra.mxu0 0
      %485 = vmatprep.mubr.bf16.mxu0 0
      %486 = vmatmul.mubr.bf16.gmra.mrb[0].mxu0 %v334
      %v487 = vpop.f32.mrb[0].mxu0
      %v488 = vadd.f32 0.0, %v487
      %v489 = vpop.f32.mrb[0].mxu0
      %v490 = vpop.f32.mrb[0].mxu0
      %v491 = vpop.f32.mrb[0].mxu0
      %492 = vdwg.mxu0
      %v493 = vpack.c.bf16 %v488, %v488
      %494 = vst.msk [vmem:[%s320] sm:$0xf] %vm377, %v493
      %v496 = vunpack.c.l.b16 %v493
      %v497 = vpack.c.b16 %v496, %v496
      %498 = vrot.lane.b32.xlu0 %v497, 120
      %v499 = vpop.permute.xlu0 %498
      %s501 = scalar_lea.vmem %s320, 4
      %502 = vst.msk [vmem:[%s501] sm:$0xf] %vm377, %v499
      %p503 = scmp.lt.s32.totalorder %s22, 1
      %s504 = scalar_select %p503, %s22, 1
      %p505 = scmp.lt.s32.totalorder %s23, 0
      %s506 = scalar_select %p505, %s23, 0
      %s507 = smul.addr %s504, 2
      %s508 = sadd.s32 %s506, %s507
      %s509 = smul.addr %s508, 4
      %s510 = scalar_lea.vmem %s4, %s509
      %p511 = scmp.lt.s32.totalorder %s22, 1
      %s512 = scalar_select %p511, %s22, 1
      %p513 = scmp.lt.s32.totalorder %s23, 0
      %s514 = scalar_select %p513, %s23, 0
      %s515 = smul.addr %s512, 2
      %s516 = sadd.s32 %s514, %s515
      %s517 = smul.addr %s516, 4
      %s518 = scalar_lea.vmem %s5, %s517
      %p519 = scmp.lt.s32.totalorder %s22, 1
      %s520 = scalar_select %p519, %s22, 1
      %p521 = scmp.lt.s32.totalorder %s23, 0
      %s522 = scalar_select %p521, %s23, 0
      %s523 = smul.addr %s520, 2
      %s524 = sadd.s32 %s522, %s523
      %s525 = smul.addr %s524, 4
      %s526 = scalar_lea.vmem %s6, %s525
      // Predicated region
      $region37: #{attention_forward.3} parent=35 // pred_check
        %p527 = pneg %p141
      $region38: #{attention_forward.3} parent=35 // pred_check_branch
        %529 = sbr.rel (%p527) target = $region40
      $region39: #{attention_forward.3} parent=35 // pred_region
        _
      $region40: #{attention_forward.3} parent=35 // pred_fallthru
        _
      // Predicated region
      $region41: #{attention_forward.3} parent=35 // pred_check
        %p530 = pneg %p169
      $region42: #{attention_forward.3} parent=35 // pred_check_branch
        %532 = sbr.rel (%p530) target = $region44
      $region43: #{attention_forward.3} parent=35 // pred_region
        _
      $region44: #{attention_forward.3} parent=35 // pred_fallthru
        _
      // Predicated region
      $region45: #{attention_forward.3} parent=35 // pred_check
        %p533 = pneg %p197
      $region46: #{attention_forward.3} parent=35 // pred_check_branch
        %535 = sbr.rel (%p533) target = $region48
      $region47: #{attention_forward.3} parent=35 // pred_region
        _
      $region48: #{attention_forward.3} parent=35 // pred_fallthru
        _
    $region36: #{attention_forward.3} parent=5 // pred_fallthru
      _
    %p536 = scmp.le.s32.totalorder 2, %s13
    // Predicated region
    $region49: #{attention_forward.3} parent=5 // pred_check
      %p537 = pneg %p536
    $region50: #{attention_forward.3} parent=5 // pred_check_branch
      %539 = sbr.rel (%p537) target = $region52
    $region51: #{attention_forward.3} parent=5 // pred_region
      %s540 = ssub.s32 %s13, 2
      // Predicated region
      $region53: #{attention_forward.3} parent=51 // pred_check
        %p541 = pneg %p147
      $region54: #{attention_forward.3} parent=51 // pred_check_branch
        %543 = sbr.rel (%p541) target = $region56
      $region55: #{attention_forward.3} parent=51 // pred_region
        %p544 = scmp.lt.s32.totalorder %s24, 1
        %s545 = scalar_select %p544, %s24, 1
        %p546 = scmp.lt.s32.totalorder %s25, 0
        %s547 = scalar_select %p546, %s25, 0
        %s548 = smul.addr %s545, 2
        %s549 = sadd.s32 %s547, %s548
        %s550 = smul.addr %s549, 4
        %s551 = scalar_lea.vmem %s4, %s550
      $region56: #{attention_forward.3} parent=51 // pred_fallthru
        _
      // Predicated region
      $region57: #{attention_forward.3} parent=51 // pred_check
        %p552 = pneg %p175
      $region58: #{attention_forward.3} parent=51 // pred_check_branch
        %554 = sbr.rel (%p552) target = $region60
      $region59: #{attention_forward.3} parent=51 // pred_region
        %p555 = scmp.lt.s32.totalorder %s24, 1
        %s556 = scalar_select %p555, %s24, 1
        %p557 = scmp.lt.s32.totalorder %s25, 0
        %s558 = scalar_select %p557, %s25, 0
        %s559 = smul.addr %s556, 2
        %s560 = sadd.s32 %s558, %s559
        %s561 = smul.addr %s560, 4
        %s562 = scalar_lea.vmem %s5, %s561
      $region60: #{attention_forward.3} parent=51 // pred_fallthru
        _
      // Predicated region
      $region61: #{attention_forward.3} parent=51 // pred_check
        %p563 = pneg %p203
      $region62: #{attention_forward.3} parent=51 // pred_check_branch
        %565 = sbr.rel (%p563) target = $region64
      $region63: #{attention_forward.3} parent=51 // pred_region
        %p566 = scmp.lt.s32.totalorder %s24, 1
        %s567 = scalar_select %p566, %s24, 1
        %p568 = scmp.lt.s32.totalorder %s25, 0
        %s569 = scalar_select %p568, %s25, 0
        %s570 = smul.addr %s567, 2
        %s571 = sadd.s32 %s569, %s570
        %s572 = smul.addr %s571, 4
        %s573 = scalar_lea.vmem %s6, %s572
      $region64: #{attention_forward.3} parent=51 // pred_fallthru
        _
    $region52: #{attention_forward.3} parent=5 // pred_fallthru
      _
  $region6: #{attention_forward.3} parent=0 // loop_footer
    %s17 = sadd.s32 1, %s13
  $region7: #{attention_forward.3} parent=0 // loop_footer_branch
    %12 = sbr.rel target = $region3
  $region8: #{attention_forward.3} parent=0 // loop_exit
    _

// kernel: attention_forward.5
$region0: #{attention_forward.5}
  #allocation0 [shape = 'u32[]', space=smem, size = 0x4, offset = 0x4, fixed_abs, tag = 'smem constant byte address 0x4 - core index']
  #allocation1 [shape = 'u32[144,128]{1,0:T(1,128)}', space=vmem, size = 0x12000, scoped, tag = 'internal scratch']
  %s0 = inlined_call_operand.vmem [shape: bf16[16,16], index: 0, kind: input, shape index: {}]
  %s1 = inlined_call_operand.vmem [shape: bf16[16,16], index: 1, kind: input, shape index: {}]
  %s2 = inlined_call_operand.vmem [shape: f32[1,16], index: 2, kind: input, shape index: {}]
  %s3 = inlined_call_operand.hbm [shape: f32[16,16], index: 3, kind: output, shape index: {}]
  %s4 = sld [smem:[#allocation0]]
  $region22: #{attention_forward.5} parent=0
    _
  %s6 = ssub.s32 1, %s4
  %s7 = scalar_select 0, %s6, %s4
  $region1: #{attention_forward.5} parent=0
    #allocation2 [shape = 'u8[8192]{0}', space=vmem, size = 0x2000, scoped, tag = 'output window, operand 0, single buffered']
    #allocation3 [shape = 's32[1]{0}', space=sflag, size = 0x4, scoped, tag = 'scoped memory for attention_forward.5']
    %8 = vsyncpa [#allocation3], 0
    // Predicated region
    $region2: #{attention_forward.5} parent=1 // pred_check
      _
    $region3: #{attention_forward.5} parent=1 // pred_check_branch
      %10 = sbr.rel (0) target = $region5
    $region4: #{attention_forward.5} parent=1 // pred_region
      _
    $region5: #{attention_forward.5} parent=1 // pred_fallthru
      _
    // Predicated region
    $region6: #{attention_forward.5} parent=1 // pred_check
      _
    $region7: #{attention_forward.5} parent=1 // pred_check_branch
      %12 = sbr.rel (0) target = $region9
    $region8: #{attention_forward.5} parent=1 // pred_region
      _
    $region9: #{attention_forward.5} parent=1 // pred_fallthru
      _
    // Predicated region
    $region10: #{attention_forward.5} parent=1 // pred_check
      _
    $region11: #{attention_forward.5} parent=1 // pred_check_branch
      %14 = sbr.rel (0) target = $region13
    $region12: #{attention_forward.5} parent=1 // pred_region
      _
    $region13: #{attention_forward.5} parent=1 // pred_fallthru
      _
    %v16 = vld [vmem:[%s0] sm:$0xf]
    %v17 = vld [vmem:[%s0 + $0x4] sm:$0xf]
    %v18 = vld [vmem:[%s1] sm:$0xf]
    %v19 = vld [vmem:[%s1 + $0x4] sm:$0xf]
    %v20 = vld [vmem:[%s2] sm:$0x1]
    %v22 = vlaneseq
    %v23 = vshrl.u32 %v22, 7
    %v24 = vsub.s32 0, %v23
    %v25 = vrot.slane %v20, %v24
    %v29 = vunpack.c.l.b16 %v16
    %v30 = vunpack.c.l.b16 %v17
    %v31 = vpack.c.b16 %v30, %v29
    %v34 = vunpack.c.l.b16 %v18
    %v35 = vunpack.c.l.b16 %v19
    %v36 = vpack.c.b16 %v35, %v34
    %vm38 = vcmask 130048
    %v40 = vsel %vm38, %v31, 0
    %42 = vmatprep.subr.bf16.mxu0 0
    %43 = vmatpush1.bf16.msra.mxu0 %v36
    %44 = vmatprep.subr.bf16.mxu0 0
    %45 = vmatpush1.bf16.msra.mxu0 0
    %46 = vmatprep.subr.bf16.mxu0 0
    %47 = vmatpush1.bf16.msra.mxu0 0
    %48 = vmatprep.subr.bf16.mxu0 0
    %49 = vmatpush1.bf16.msra.mxu0 0
    %50 = vmatprep.subr.bf16.mxu0 0
    %51 = vmatpush1.bf16.msra.mxu0 0
    %52 = vmatprep.subr.bf16.mxu0 0
    %53 = vmatpush1.bf16.msra.mxu0 0
    %54 = vmatprep.subr.bf16.mxu0 0
    %55 = vmatpush1.bf16.msra.mxu0 0
    %56 = vmatprep.subr.bf16.mxu0 0
    %57 = vmatpush1.bf16.msra.mxu0 0
    %58 = vmatprep.subr.bf16.mxu0 0
    %59 = vmatpush1.bf16.msra.mxu0 0
    %60 = vmatprep.subr.bf16.mxu0 0
    %61 = vmatpush1.bf16.msra.mxu0 0
    %62 = vmatprep.subr.bf16.mxu0 0
    %63 = vmatpush1.bf16.msra.mxu0 0
    %64 = vmatprep.subr.bf16.mxu0 0
    %65 = vmatpush1.bf16.msra.mxu0 0
    %66 = vmatprep.subr.bf16.mxu0 0
    %67 = vmatpush1.bf16.msra.mxu0 0
    %68 = vmatprep.subr.bf16.mxu0 0
    %69 = vmatpush1.bf16.msra.mxu0 0
    %70 = vmatprep.subr.bf16.mxu0 0
    %71 = vmatpush1.bf16.msra.mxu0 0
    %72 = vmatprep.subr.bf16.mxu0 0
    %73 = vmatpush1.bf16.msra.mxu0 0
    %74 = vmatprep.mubr.bf16.mxu0 0
    %75 = vmatmul.mubr.bf16.gmra.mrb[0].mxu0 %v40
    %v76 = vpop.f32.mrb[0].mxu0
    %v77 = vadd.f32 %v25, %v76
    %v78 = vpop.f32.mrb[0].mxu0
    %v79 = vpop.f32.mrb[0].mxu0
    %v80 = vadd.f32 %v25, %v79
    %v81 = vpop.f32.mrb[0].mxu0
    %82 = vdwg.mxu0
    %83 = vst.msk [vmem:[#allocation2] sm:$0xff] %vm38, %v77
    %84 = vst.msk [vmem:[#allocation2 + $0x8] sm:$0xff] %vm38, %v80
    // Predicated region
    $region14: #{attention_forward.5} parent=1 // pred_check
      _
    $region15: #{attention_forward.5} parent=1 // pred_check_branch
      %86 = sbr.rel (0) target = $region17
    $region16: #{attention_forward.5} parent=1 // pred_region
      %s88 = ssub.s32 256, 256
      %89 = vsyncadd [#allocation3], %s88
      %s90 = sshll.u32 [#allocation2], 4
      %s91 = int_to_ptr.vmem [resolvable:$true] %s90
      %96 = dma.vmem_to_hbm [thread:$0]  %s91, 256, %s3, [#allocation3], 128, 128, 8
    $region17: #{attention_forward.5} parent=1 // pred_fallthru
      _
    // Predicated region
    $region18: #{attention_forward.5} parent=1 // pred_check
      _
    $region19: #{attention_forward.5} parent=1 // pred_check_branch
      %98 = sbr.rel (0) target = $region21
    $region20: #{attention_forward.5} parent=1 // pred_region
      %99 = dma.done [#allocation3], 256
    $region21: #{attention_forward.5} parent=1 // pred_fallthru
      _
    %100 = vsyncpa [#allocation3], 1

// kernel: attention_forward.4
$region0: #{attention_forward.4}
  #allocation0 [shape = 'u32[]', space=smem, size = 0x4, offset = 0x4, fixed_abs, tag = 'smem constant byte address 0x4 - core index']
  #allocation1 [shape = 'u32[144,128]{1,0:T(1,128)}', space=vmem, size = 0x12000, scoped, tag = 'internal scratch']
  #allocation2 [shape = 'f32[2,8,1]{2,1,0:T(8,128)}', space=vmem, size = 0x2000, scoped, tag = 'scratch operand']
  #allocation3 [shape = 'f32[2,8,1]{2,1,0:T(8,128)}', space=vmem, size = 0x2000, scoped, tag = 'scratch operand']
  #allocation4 [shape = 'f32[2,8,8]{2,1,0:T(8,128)}', space=vmem, size = 0x2000, scoped, tag = 'scratch operand']
  %s0 = inlined_call_operand.vmem [shape: bf16[2,2,8,8], index: 0, kind: input, shape index: {}]
  %s1 = inlined_call_operand.vmem [shape: bf16[2,2,8,8], index: 1, kind: input, shape index: {}]
  %s2 = inlined_call_operand.vmem [shape: bf16[2,2,8,8], index: 2, kind: input, shape index: {}]
  %s3 = inlined_call_operand.vmem [shape: bf16[2,8,16], index: 3, kind: output, shape index: {}]
  %s4 = sld [smem:[#allocation0]]
  $region53: #{attention_forward.4} parent=0
    _
  %s6 = ssub.s32 1, %s4
  %s7 = scalar_select 0, %s6, %s4
  loop: start=0, step=1, limit=4
  $region2: #{attention_forward.4} parent=0 // loop_pre_header
    _
  $region3: #{attention_forward.4} parent=0 // loop_header
    %s9 = sphi 0, %s13
    %p10 = scmp.ge.s32.totalorder %s9, 4
    %s16 = sphi 0, %s35
    %s17 = sphi 0, %s31
    %s18 = sphi 0, %s27
    %s19 = sphi 0, %s16
    %s20 = sphi 0, %s17
    %s21 = sphi 0, %s18
    %s22 = sphi 0, %s19
    %s23 = sphi 0, %s20
    %s24 = sphi 0, %s21
    %s40 = sphi 0, %s42
    %s43 = sphi 0, %s40
    %s44 = sphi 0, %s43
    %s60 = sphi 0, %s44
    %s68 = sphi 0, %s70
    %s71 = sphi 0, %s68
    %s72 = sphi 0, %s71
    %s88 = sphi 0, %s72
    %s96 = sphi 0, %s98
    %s99 = sphi 0, %s96
    %s100 = sphi 0, %s99
    %s116 = sphi 0, %s100
    %s124 = sphi 0, %s126
    %s127 = sphi 0, %s124
    %s128 = sphi 0, %s127
    %s144 = sphi 0, %s128
  $region4: #{attention_forward.4} parent=0 // loop_header_branch
    %12 = sbr.rel (%p10) target = $region8
  $region5: #{attention_forward.4} parent=0 // loop_body
    %s14 = ssub.s32 %s9, 1
    %s15 = ssub.s32 %s9, 2
    %s25 = sadd.s32 1, %s18
    %p26 = scmp.ge.s32.totalorder %s25, 1
    %s27 = scalar_select %p26, 0, %s25
    %s28 = sadd.s32 1, %s17
    %s29 = scalar_select %p26, %s28, %s17
    %p30 = scmp.ge.s32.totalorder %s29, 1
    %s31 = scalar_select %p30, 0, %s29
    %s32 = sadd.s32 1, %s16
    %s33 = scalar_select %p30, %s32, %s16
    %p34 = scmp.ge.s32.totalorder %s33, 2
    %s35 = scalar_select %p34, 0, %s33
    %s36 = ssub.s32 %s16, %s35
    %s37 = ssub.s32 %s17, %s31
    %s38 = sor.u32 %s36, %s37
    %p39 = scmp.eq.s32.totalorder %s38, 0
    %s41 = sadd.s32 %s40, 1
    %s42 = scalar_select %p39, %s40, %s41
    %p45 = pneg %p39
    %p46 = scmp.eq.s32.totalorder %s9, 1
    %p47 = por %p45, %p46
    %p48 = scmp.ne.s32.totalorder %s40, %s43
    %p49 = scmp.eq.s32.totalorder %s9, 0
    %p50 = por %p48, %p49
    %p51 = scmp.ne.s32.totalorder %s40, %s43
    %p52 = scmp.eq.s32.totalorder %s14, 1
    %p53 = por %p51, %p52
    %p54 = scmp.ne.s32.totalorder %s43, %s44
    %p55 = scmp.eq.s32.totalorder %s14, 0
    %p56 = por %p54, %p55
    %p57 = scmp.ne.s32.totalorder %s43, %s44
    %p58 = scmp.eq.s32.totalorder %s15, 1
    %p59 = por %p57, %p58
    %p61 = scmp.ne.s32.totalorder %s44, %s60
    %p62 = scmp.eq.s32.totalorder %s15, 0
    %p63 = por %p61, %p62
    %s64 = ssub.s32 %s16, %s35
    %s65 = ssub.s32 %s18, %s27
    %s66 = sor.u32 %s64, %s65
    %p67 = scmp.eq.s32.totalorder %s66, 0
    %s69 = sadd.s32 %s68, 1
    %s70 = scalar_select %p67, %s68, %s69
    %p73 = pneg %p67
    %p74 = scmp.eq.s32.totalorder %s9, 1
    %p75 = por %p73, %p74
    %p76 = scmp.ne.s32.totalorder %s68, %s71
    %p77 = scmp.eq.s32.totalorder %s9, 0
    %p78 = por %p76, %p77
    %p79 = scmp.ne.s32.totalorder %s68, %s71
    %p80 = scmp.eq.s32.totalorder %s14, 1
    %p81 = por %p79, %p80
    %p82 = scmp.ne.s32.totalorder %s71, %s72
    %p83 = scmp.eq.s32.totalorder %s14, 0
    %p84 = por %p82, %p83
    %p85 = scmp.ne.s32.totalorder %s71, %s72
    %p86 = scmp.eq.s32.totalorder %s15, 1
    %p87 = por %p85, %p86
    %p89 = scmp.ne.s32.totalorder %s72, %s88
    %p90 = scmp.eq.s32.totalorder %s15, 0
    %p91 = por %p89, %p90
    %s92 = ssub.s32 %s16, %s35
    %s93 = ssub.s32 %s18, %s27
    %s94 = sor.u32 %s92, %s93
    %p95 = scmp.eq.s32.totalorder %s94, 0
    %s97 = sadd.s32 %s96, 1
    %s98 = scalar_select %p95, %s96, %s97
    %p101 = pneg %p95
    %p102 = scmp.eq.s32.totalorder %s9, 1
    %p103 = por %p101, %p102
    %p104 = scmp.ne.s32.totalorder %s96, %s99
    %p105 = scmp.eq.s32.totalorder %s9, 0
    %p106 = por %p104, %p105
    %p107 = scmp.ne.s32.totalorder %s96, %s99
    %p108 = scmp.eq.s32.totalorder %s14, 1
    %p109 = por %p107, %p108
    %p110 = scmp.ne.s32.totalorder %s99, %s100
    %p111 = scmp.eq.s32.totalorder %s14, 0
    %p112 = por %p110, %p111
    %p113 = scmp.ne.s32.totalorder %s99, %s100
    %p114 = scmp.eq.s32.totalorder %s15, 1
    %p115 = por %p113, %p114
    %p117 = scmp.ne.s32.totalorder %s100, %s116
    %p118 = scmp.eq.s32.totalorder %s15, 0
    %p119 = por %p117, %p118
    %s120 = ssub.s32 %s16, %s35
    %s121 = ssub.s32 %s17, %s31
    %s122 = sor.u32 %s120, %s121
    %p123 = scmp.eq.s32.totalorder %s122, 0
    %s125 = sadd.s32 %s124, 1
    %s126 = scalar_select %p123, %s124, %s125
    %p129 = pneg %p123
    %p130 = scmp.eq.s32.totalorder %s9, 1
    %p131 = por %p129, %p130
    %p132 = scmp.ne.s32.totalorder %s124, %s127
    %p133 = scmp.eq.s32.totalorder %s9, 0
    %p134 = por %p132, %p133
    %p135 = scmp.ne.s32.totalorder %s124, %s127
    %p136 = scmp.eq.s32.totalorder %s14, 1
    %p137 = por %p135, %p136
    %p138 = scmp.ne.s32.totalorder %s127, %s128
    %p139 = scmp.eq.s32.totalorder %s14, 0
    %p140 = por %p138, %p139
    %p141 = scmp.ne.s32.totalorder %s127, %s128
    %p142 = scmp.eq.s32.totalorder %s15, 1
    %p143 = por %p141, %p142
    %p145 = scmp.ne.s32.totalorder %s128, %s144
    %p146 = scmp.eq.s32.totalorder %s15, 0
    %p147 = por %p145, %p146
    %p148 = scmp.le.s32.totalorder 1, %s9
    %p149 = scmp.lt.s32.totalorder %s9, 3
    %p150 = pnand %p148, %p149
    %p151 = pneg %p150
    // Predicated region
    $region9: #{attention_forward.4} parent=5 // pred_check
      _
    $region10: #{attention_forward.4} parent=5 // pred_check_branch
      %153 = sbr.rel (%p150) target = $region12
    $region11: #{attention_forward.4} parent=5 // pred_region
      %s154 = ssub.s32 %s9, 1
    $region12: #{attention_forward.4} parent=5 // pred_fallthru
      _
    %p155 = scmp.lt.s32.totalorder %s9, 2
    // Predicated region
    $region13: #{attention_forward.4} parent=5 // pred_check
      %p156 = pneg %p155
    $region14: #{attention_forward.4} parent=5 // pred_check_branch
      %158 = sbr.rel (%p156) target = $region16
    $region15: #{attention_forward.4} parent=5 // pred_region
      // Predicated region
      $region17: #{attention_forward.4} parent=15 // pred_check
        %p159 = pneg %p50
      $region18: #{attention_forward.4} parent=15 // pred_check_branch
        %161 = sbr.rel (%p159) target = $region20
      $region19: #{attention_forward.4} parent=15 // pred_region
        %p162 = scmp.lt.s32.totalorder %s16, 1
        %s163 = scalar_select %p162, %s16, 1
        %p164 = scmp.lt.s32.totalorder %s17, 0
        %s165 = scalar_select %p164, %s17, 0
        %s166 = smul.addr %s163, 2
        %s167 = sadd.s32 %s165, %s166
        %s168 = smul.addr %s167, 4
        %s169 = scalar_lea.vmem %s0, %s168
      $region20: #{attention_forward.4} parent=15 // pred_fallthru
        _
      // Predicated region
      $region21: #{attention_forward.4} parent=15 // pred_check
        %p170 = pneg %p78
      $region22: #{attention_forward.4} parent=15 // pred_check_branch
        %172 = sbr.rel (%p170) target = $region24
      $region23: #{attention_forward.4} parent=15 // pred_region
        %p173 = scmp.lt.s32.totalorder %s16, 1
        %s174 = scalar_select %p173, %s16, 1
        %p175 = scmp.lt.s32.totalorder %s18, 0
        %s176 = scalar_select %p175, %s18, 0
        %s177 = smul.addr %s174, 2
        %s178 = sadd.s32 %s176, %s177
        %s179 = smul.addr %s178, 4
        %s180 = scalar_lea.vmem %s1, %s179
      $region24: #{attention_forward.4} parent=15 // pred_fallthru
        _
      // Predicated region
      $region25: #{attention_forward.4} parent=15 // pred_check
        %p181 = pneg %p106
      $region26: #{attention_forward.4} parent=15 // pred_check_branch
        %183 = sbr.rel (%p181) target = $region28
      $region27: #{attention_forward.4} parent=15 // pred_region
        %p184 = scmp.lt.s32.totalorder %s16, 1
        %s185 = scalar_select %p184, %s16, 1
        %p186 = scmp.lt.s32.totalorder %s18, 0
        %s187 = scalar_select %p186, %s18, 0
        %s188 = smul.addr %s185, 2
        %s189 = sadd.s32 %s187, %s188
        %s190 = smul.addr %s189, 4
        %s191 = scalar_lea.vmem %s2, %s190
      $region28: #{attention_forward.4} parent=15 // pred_fallthru
        _
    $region16: #{attention_forward.4} parent=5 // pred_fallthru
      _
    %p192 = scmp.le.s32.totalorder 1, %s9
    %p193 = scmp.lt.s32.totalorder %s9, 3
    %p194 = pnand %p192, %p193
    %p195 = pneg %p194
    // Predicated region
    $region29: #{attention_forward.4} parent=5 // pred_check
      _
    $region30: #{attention_forward.4} parent=5 // pred_check_branch
      %197 = sbr.rel (%p194) target = $region32
    $region31: #{attention_forward.4} parent=5 // pred_region
      %s198 = ssub.s32 %s9, 1
      %p199 = scmp.lt.s32.totalorder %s19, 1
      %s200 = scalar_select %p199, %s19, 1
      %p201 = scmp.lt.s32.totalorder %s20, 0
      %s202 = scalar_select %p201, %s20, 0
      %s203 = smul.addr %s200, 2
      %s204 = sadd.s32 %s202, %s203
      %s205 = smul.addr %s204, 4
      %s206 = scalar_lea.vmem %s0, %s205
      %p207 = pneg %p56
      %p208 = pneg %p53
      %p209 = scmp.lt.s32.totalorder %s19, 1
      %s210 = scalar_select %p209, %s19, 1
      %p211 = scmp.lt.s32.totalorder %s21, 0
      %s212 = scalar_select %p211, %s21, 0
      %s213 = smul.addr %s210, 2
      %s214 = sadd.s32 %s212, %s213
      %s215 = smul.addr %s214, 4
      %s216 = scalar_lea.vmem %s1, %s215
      %p217 = pneg %p84
      %p218 = pneg %p81
      %p219 = scmp.lt.s32.totalorder %s19, 1
      %s220 = scalar_select %p219, %s19, 1
      %p221 = scmp.lt.s32.totalorder %s21, 0
      %s222 = scalar_select %p221, %s21, 0
      %s223 = smul.addr %s220, 2
      %s224 = sadd.s32 %s222, %s223
      %s225 = smul.addr %s224, 4
      %s226 = scalar_lea.vmem %s2, %s225
      %p227 = pneg %p112
      %p228 = pneg %p109
      %p229 = pneg %p140
      %p230 = pneg %p137
      %p231 = scmp.lt.s32.totalorder %s19, 1
      %s232 = scalar_select %p231, %s19, 1
      %p233 = scmp.lt.s32.totalorder %s20, 0
      %s234 = scalar_select %p233, %s20, 0
      %s235 = sadd.s32 %s234, %s232
      %s236 = smul.addr %s235, 4
      %s237 = scalar_lea.vmem %s3, %s236
      %p238 = scmp.lt.s32.totalorder %s19, 1
      %s239 = scalar_select %p238, %s19, 1
      %p240 = scmp.lt.s32.totalorder %s20, 0
      %s241 = scalar_select %p240, %s20, 0
      %s242 = smul.addr %s239, 2
      %s243 = sadd.s32 %s241, %s242
      %s244 = smul.addr %s243, 4
      %s245 = scalar_lea.vmem %s0, %s244
      %p246 = scmp.lt.s32.totalorder %s19, 1
      %s247 = scalar_select %p246, %s19, 1
      %p248 = scmp.lt.s32.totalorder %s21, 0
      %s249 = scalar_select %p248, %s21, 0
      %s250 = smul.addr %s247, 2
      %s251 = sadd.s32 %s249, %s250
      %s252 = smul.addr %s251, 4
      %s253 = scalar_lea.vmem %s1, %s252
      %p254 = scmp.lt.s32.totalorder %s19, 1
      %s255 = scalar_select %p254, %s19, 1
      %p256 = scmp.lt.s32.totalorder %s21, 0
      %s257 = scalar_select %p256, %s21, 0
      %s258 = smul.addr %s255, 2
      %s259 = sadd.s32 %s257, %s258
      %s260 = smul.addr %s259, 4
      %s261 = scalar_lea.vmem %s2, %s260
      %p262 = scmp.lt.s32.totalorder %s19, 1
      %s263 = scalar_select %p262, %s19, 1
      %p264 = scmp.lt.s32.totalorder %s20, 0
      %s265 = scalar_select %p264, %s20, 0
      %s266 = sadd.s32 %s265, %s263
      %s267 = smul.addr %s266, 4
      %s268 = scalar_lea.vmem %s3, %s267
      %p270 = scmp.eq.s32.totalorder %s21, 0
      // Predicated region
      $region33: #{attention_forward.4} parent=31 // pred_check
        %p271 = pneg %p270
      $region34: #{attention_forward.4} parent=31 // pred_check_branch
        %273 = sbr.rel (%p271) target = $region36
      $region35: #{attention_forward.4} parent=31 // pred_region
        %vm274 = vcmask 7168
        %275 = vst.msk [vmem:[#allocation2] sm:$0xff] %vm274, -1e+30
        %276 = vst.msk [vmem:[#allocation2 + $0x8] sm:$0xff] %vm274, -1e+30
        %277 = vst.msk [vmem:[#allocation3] sm:$0xff] %vm274, 0.0
        %278 = vst.msk [vmem:[#allocation3 + $0x8] sm:$0xff] %vm274, 0.0
        %vm279 = vcmask 64512
        %280 = vst.msk [vmem:[#allocation4] sm:$0xff] %vm279, 0.0
        %281 = vst.msk [vmem:[#allocation4 + $0x8] sm:$0xff] %vm279, 0.0
      $region36: #{attention_forward.4} parent=31 // pred_fallthru
        _
      %v282 = vld [vmem:[%s245] sm:$0xf]
      %v283 = vld [vmem:[%s245 + $0x4] sm:$0xf]
      %v284 = vunpack.c.l.bf16 %v282
      %v285 = vunpack.c.l.bf16 %v283
      %v286 = vmul.f32 %v284, 0.35355338
      %v287 = vmul.f32 %v285, 0.35355338
      %v288 = vpack.c.bf16 %v286, %v286
      %v289 = vpack.c.bf16 %v287, %v287
      %v290 = vld [vmem:[%s253] sm:$0xf]
      %v291 = vld [vmem:[%s253 + $0x4] sm:$0xf]
      %v292 = vld [vmem:[%s261] sm:$0xf]
      %v293 = vld [vmem:[%s261 + $0x4] sm:$0xf]
      %vm294 = vcmask 64512
      %v296 = vsel %vm294, %v288, 0
      %v299 = vsel %vm294, %v290, 0
      %301 = vmatprep.subr.bf16.mxu0 0
      %302 = vmatpush1.bf16.xpose.msra.mxu0 %v299
      %303 = vmatprep.subr.bf16.mxu0 0
      %304 = vmatpush1.bf16.xpose.msra.mxu0 0
      %305 = vmatprep.subr.bf16.mxu0 0
      %306 = vmatpush1.bf16.xpose.msra.mxu0 0
      %307 = vmatprep.subr.bf16.mxu0 0
      %308 = vmatpush1.bf16.xpose.msra.mxu0 0
      %309 = vmatprep.subr.bf16.mxu0 0
      %310 = vmatpush1.bf16.xpose.msra.mxu0 0
      %311 = vmatprep.subr.bf16.mxu0 0
      %312 = vmatpush1.bf16.xpose.msra.mxu0 0
      %313 = vmatprep.subr.bf16.mxu0 0
      %314 = vmatpush1.bf16.xpose.msra.mxu0 0
      %315 = vmatprep.subr.bf16.mxu0 0
      %316 = vmatpush1.bf16.xpose.msra.mxu0 0
      %317 = vmatprep.subr.bf16.mxu0 0
      %318 = vmatpush1.bf16.xpose.msra.mxu0 0
      %319 = vmatprep.subr.bf16.mxu0 0
      %320 = vmatpush1.bf16.xpose.msra.mxu0 0
      %321 = vmatprep.subr.bf16.mxu0 0
      %322 = vmatpush1.bf16.xpose.msra.mxu0 0
      %323 = vmatprep.subr.bf16.mxu0 0
      %324 = vmatpush1.bf16.xpose.msra.mxu0 0
      %325 = vmatprep.subr.bf16.mxu0 0
      %326 = vmatpush1.bf16.xpose.msra.mxu0 0
      %327 = vmatprep.subr.bf16.mxu0 0
      %328 = vmatpush1.bf16.xpose.msra.mxu0 0
      %329 = vmatprep.subr.bf16.mxu0 0
      %330 = vmatpush1.bf16.xpose.msra.mxu0 0
      %331 = vmatprep.subr.bf16.mxu0 0
      %332 = vmatpush1.bf16.xpose.msra.mxu0 0
      %333 = vmatprep.mubr.bf16.mxu0 0
      %334 = vmatmul.mubr.bf16.gmra.mrb[0].mxu0 %v296
      %v335 = vpop.f32.mrb[0].mxu0
      %v336 = vadd.f32 0.0, %v335
      %v337 = vpop.f32.mrb[0].mxu0
      %v338 = vpop.f32.mrb[0].mxu0
      %v339 = vpop.f32.mrb[0].mxu0
      %340 = vdwg.mxu0
      %v342 = vsel %vm294, %v289, 0
      %v345 = vsel %vm294, %v291, 0
      %347 = vmatprep.subr.bf16.mxu0 0
      %348 = vmatpush1.bf16.xpose.msra.mxu0 %v345
      %349 = vmatprep.subr.bf16.mxu0 0
      %350 = vmatpush1.bf16.xpose.msra.mxu0 0
      %351 = vmatprep.subr.bf16.mxu0 0
      %352 = vmatpush1.bf16.xpose.msra.mxu0 0
      %353 = vmatprep.subr.bf16.mxu0 0
      %354 = vmatpush1.bf16.xpose.msra.mxu0 0
      %355 = vmatprep.subr.bf16.mxu0 0
      %356 = vmatpush1.bf16.xpose.msra.mxu0 0
      %357 = vmatprep.subr.bf16.mxu0 0
      %358 = vmatpush1.bf16.xpose.msra.mxu0 0
      %359 = vmatprep.subr.bf16.mxu0 0
      %360 = vmatpush1.bf16.xpose.msra.mxu0 0
      %361 = vmatprep.subr.bf16.mxu0 0
      %362 = vmatpush1.bf16.xpose.msra.mxu0 0
      %363 = vmatprep.subr.bf16.mxu0 0
      %364 = vmatpush1.bf16.xpose.msra.mxu0 0
      %365 = vmatprep.subr.bf16.mxu0 0
      %366 = vmatpush1.bf16.xpose.msra.mxu0 0
      %367 = vmatprep.subr.bf16.mxu0 0
      %368 = vmatpush1.bf16.xpose.msra.mxu0 0
      %369 = vmatprep.subr.bf16.mxu0 0
      %370 = vmatpush1.bf16.xpose.msra.mxu0 0
      %371 = vmatprep.subr.bf16.mxu0 0
      %372 = vmatpush1.bf16.xpose.msra.mxu0 0
      %373 = vmatprep.subr.bf16.mxu0 0
      %374 = vmatpush1.bf16.xpose.msra.mxu0 0
      %375 = vmatprep.subr.bf16.mxu0 0
      %376 = vmatpush1.bf16.xpose.msra.mxu0 0
      %377 = vmatprep.subr.bf16.mxu0 0
      %378 = vmatpush1.bf16.xpose.msra.mxu0 0
      %379 = vmatprep.mubr.bf16.mxu0 0
      %380 = vmatmul.mubr.bf16.gmra.mrb[0].mxu0 %v342
      %v381 = vpop.f32.mrb[0].mxu0
      %v382 = vadd.f32 0.0, %v381
      %v383 = vpop.f32.mrb[0].mxu0
      %v384 = vpop.f32.mrb[0].mxu0
      %v385 = vpop.f32.mrb[0].mxu0
      %386 = vdwg.mxu0
      %v387 = vld [vmem:[#allocation2] sm:$0xff]
      %v388 = vld [vmem:[#allocation2 + $0x8] sm:$0xff]
      %v389 = vsel %vm294, %v336, -inf
      %390 = vmax.xlane.f32.xlu0 %v389
      %v391 = vpop.xlane.xlu0 %390
      %v392 = vsel %vm294, %v382, -inf
      %393 = vmax.xlane.f32.xlu0 %v392
      %v394 = vpop.xlane.xlu0 %393
      %v395 = vmax.f32 %v387, %v391
      %v396 = vmax.f32 %v388, %v394
      %v397 = vsub.f32 %v387, %v395
      %v398 = vsub.f32 %v388, %v396
      %v399 = vmul.f32 %v397, 1.442695
      %v400 = vpow.pop %v399
      %v401 = vmul.f32 %v398, 1.442695
      %v402 = vpow.pop %v401
      %404 = vset.pattern.permute.xlu0 0
      %405 = vperm.xlu0 %404, %v395
      %v406 = vpop.permute.xlu0 %405
      %409 = vset.pattern.permute.xlu0 0
      %410 = vperm.xlu0 %409, %v396
      %v411 = vpop.permute.xlu0 %410
      %v413 = vsub.f32 %v336, %v406
      %v414 = vsub.f32 %v382, %v411
      %v415 = vmul.f32 %v413, 1.442695
      %v416 = vpow.pop %v415
      %v417 = vmul.f32 %v414, 1.442695
      %v418 = vpow.pop %v417
      %v419 = vld [vmem:[#allocation3] sm:$0xff]
      %v420 = vld [vmem:[#allocation3 + $0x8] sm:$0xff]
      %v421 = vmul.f32 %v400, %v419
      %v422 = vmul.f32 %v402, %v420
      %v423 = vsel %vm294, %v416, 0.0
      %424 = vadd.xlane.f32.xlu0 %v423
      %v425 = vpop.xlane.xlu0 %424
      %v426 = vsel %vm294, %v418, 0.0
      %427 = vadd.xlane.f32.xlu0 %v426
      %v428 = vpop.xlane.xlu0 %427
      %v429 = vadd.f32 %v421, %v425
      %v430 = vadd.f32 %v422, %v428
      %vm431 = vcmask 7168
      %432 = vst.msk [vmem:[#allocation3] sm:$0xff] %vm431, %v429
      %433 = vst.msk [vmem:[#allocation3 + $0x8] sm:$0xff] %vm431, %v430
      %v434 = vld [vmem:[#allocation4] sm:$0xff]
      %v435 = vld [vmem:[#allocation4 + $0x8] sm:$0xff]
      %437 = vset.pattern.permute.xlu0 0
      %438 = vperm.xlu0 %437, %v400
      %v439 = vpop.permute.xlu0 %438
      %442 = vset.pattern.permute.xlu0 0
      %443 = vperm.xlu0 %442, %v402
      %v444 = vpop.permute.xlu0 %443
      %v446 = vmul.f32 %v439, %v434
      %v447 = vmul.f32 %v444, %v435
      %v448 = vpack.c.bf16 %v416, %v416
      %v449 = vpack.c.bf16 %v418, %v418
      %v451 = vsel %vm294, %v448, 0
      %vm453 = vcmask 1043456
      %v455 = vsel %vm453, %v292, 0
      %457 = vmatprep.subr.bf16.mxu0 0
      %458 = vmatpush1.bf16.msra.mxu0 %v455
      %459 = vmatprep.subr.bf16.mxu0 0
      %460 = vmatpush1.bf16.msra.mxu0 0
      %461 = vmatprep.subr.bf16.mxu0 0
      %462 = vmatpush1.bf16.msra.mxu0 0
      %463 = vmatprep.subr.bf16.mxu0 0
      %464 = vmatpush1.bf16.msra.mxu0 0
      %465 = vmatprep.subr.bf16.mxu0 0
      %466 = vmatpush1.bf16.msra.mxu0 0
      %467 = vmatprep.subr.bf16.mxu0 0
      %468 = vmatpush1.bf16.msra.mxu0 0
      %469 = vmatprep.subr.bf16.mxu0 0
      %470 = vmatpush1.bf16.msra.mxu0 0
      %471 = vmatprep.subr.bf16.mxu0 0
      %472 = vmatpush1.bf16.msra.mxu0 0
      %473 = vmatprep.subr.bf16.mxu0 0
      %474 = vmatpush1.bf16.msra.mxu0 0
      %475 = vmatprep.subr.bf16.mxu0 0
      %476 = vmatpush1.bf16.msra.mxu0 0
      %477 = vmatprep.subr.bf16.mxu0 0
      %478 = vmatpush1.bf16.msra.mxu0 0
      %479 = vmatprep.subr.bf16.mxu0 0
      %480 = vmatpush1.bf16.msra.mxu0 0
      %481 = vmatprep.subr.bf16.mxu0 0
      %482 = vmatpush1.bf16.msra.mxu0 0
      %483 = vmatprep.subr.bf16.mxu0 0
      %484 = vmatpush1.bf16.msra.mxu0 0
      %485 = vmatprep.subr.bf16.mxu0 0
      %486 = vmatpush1.bf16.msra.mxu0 0
      %487 = vmatprep.subr.bf16.mxu0 0
      %488 = vmatpush1.bf16.msra.mxu0 0
      %489 = vmatprep.mubr.bf16.mxu0 0
      %490 = vmatmul.mubr.bf16.gmra.mrb[0].mxu0 %v451
      %v491 = vpop.f32.mrb[0].mxu0
      %v492 = vadd.f32 0.0, %v491
      %v493 = vpop.f32.mrb[0].mxu0
      %v494 = vpop.f32.mrb[0].mxu0
      %v495 = vpop.f32.mrb[0].mxu0
      %496 = vdwg.mxu0
      %v498 = vsel %vm294, %v449, 0
      %v501 = vsel %vm453, %v293, 0
      %503 = vmatprep.subr.bf16.mxu0 0
      %504 = vmatpush1.bf16.msra.mxu0 %v501
      %505 = vmatprep.subr.bf16.mxu0 0
      %506 = vmatpush1.bf16.msra.mxu0 0
      %507 = vmatprep.subr.bf16.mxu0 0
      %508 = vmatpush1.bf16.msra.mxu0 0
      %509 = vmatprep.subr.bf16.mxu0 0
      %510 = vmatpush1.bf16.msra.mxu0 0
      %511 = vmatprep.subr.bf16.mxu0 0
      %512 = vmatpush1.bf16.msra.mxu0 0
      %513 = vmatprep.subr.bf16.mxu0 0
      %514 = vmatpush1.bf16.msra.mxu0 0
      %515 = vmatprep.subr.bf16.mxu0 0
      %516 = vmatpush1.bf16.msra.mxu0 0
      %517 = vmatprep.subr.bf16.mxu0 0
      %518 = vmatpush1.bf16.msra.mxu0 0
      %519 = vmatprep.subr.bf16.mxu0 0
      %520 = vmatpush1.bf16.msra.mxu0 0
      %521 = vmatprep.subr.bf16.mxu0 0
      %522 = vmatpush1.bf16.msra.mxu0 0
      %523 = vmatprep.subr.bf16.mxu0 0
      %524 = vmatpush1.bf16.msra.mxu0 0
      %525 = vmatprep.subr.bf16.mxu0 0
      %526 = vmatpush1.bf16.msra.mxu0 0
      %527 = vmatprep.subr.bf16.mxu0 0
      %528 = vmatpush1.bf16.msra.mxu0 0
      %529 = vmatprep.subr.bf16.mxu0 0
      %530 = vmatpush1.bf16.msra.mxu0 0
      %531 = vmatprep.subr.bf16.mxu0 0
      %532 = vmatpush1.bf16.msra.mxu0 0
      %533 = vmatprep.subr.bf16.mxu0 0
      %534 = vmatpush1.bf16.msra.mxu0 0
      %535 = vmatprep.mubr.bf16.mxu0 0
      %536 = vmatmul.mubr.bf16.gmra.mrb[0].mxu0 %v498
      %v537 = vpop.f32.mrb[0].mxu0
      %v538 = vadd.f32 0.0, %v537
      %v539 = vpop.f32.mrb[0].mxu0
      %v540 = vpop.f32.mrb[0].mxu0
      %v541 = vpop.f32.mrb[0].mxu0
      %542 = vdwg.mxu0
      %v543 = vadd.f32 %v446, %v492
      %v544 = vadd.f32 %v447, %v538
      %545 = vst.msk [vmem:[#allocation4] sm:$0xff] %vm294, %v543
      %546 = vst.msk [vmem:[#allocation4 + $0x8] sm:$0xff] %vm294, %v544
      %547 = vst.msk [vmem:[#allocation2] sm:$0xff] %vm431, %v395
      %548 = vst.msk [vmem:[#allocation2 + $0x8] sm:$0xff] %vm431, %v396
      // Predicated region
      $region37: #{attention_forward.4} parent=31 // pred_check
        %p549 = pneg %p270
      $region38: #{attention_forward.4} parent=31 // pred_check_branch
        %551 = sbr.rel (%p549) target = $region40
      $region39: #{attention_forward.4} parent=31 // pred_region
        %v552 = vld [vmem:[#allocation4] sm:$0xff]
        %v553 = vld [vmem:[#allocation4 + $0x8] sm:$0xff]
        %v554 = vld [vmem:[#allocation3] sm:$0xff]
        %v555 = vld [vmem:[#allocation3 + $0x8] sm:$0xff]
        %v556 = vrcp.pop %v554
        %v557 = vrcp.pop %v555
        %559 = vset.pattern.permute.xlu0 0
        %560 = vperm.xlu0 %559, %v556
        %v561 = vpop.permute.xlu0 %560
        %564 = vset.pattern.permute.xlu0 0
        %565 = vperm.xlu0 %564, %v557
        %v566 = vpop.permute.xlu0 %565
        %v568 = vmul.f32 %v552, %v561
        %v569 = vmul.f32 %v553, %v566
        %571 = vrot.lane.b32.xlu0 %v569, 8
        %v572 = vpop.permute.xlu0 %571
        %v574 = vsel %vm294, %v568, %v572
        %v575 = vpack.c.bf16 %v574, %v574
        %vm576 = vcmask 125952
        %577 = vst.msk [vmem:[%s268] sm:$0xf] %vm576, %v575
      $region40: #{attention_forward.4} parent=31 // pred_fallthru
        _
      %p578 = scmp.lt.s32.totalorder %s19, 1
      %s579 = scalar_select %p578, %s19, 1
      %p580 = scmp.lt.s32.totalorder %s20, 0
      %s581 = scalar_select %p580, %s20, 0
      %s582 = sadd.s32 %s581, %s579
      %s583 = smul.addr %s582, 4
      %s584 = scalar_lea.vmem %s3, %s583
      // Predicated region
      $region41: #{attention_forward.4} parent=31 // pred_check
        %p585 = pneg %p137
      $region42: #{attention_forward.4} parent=31 // pred_check_branch
        %587 = sbr.rel (%p585) target = $region44
      $region43: #{attention_forward.4} parent=31 // pred_region
        _
      $region44: #{attention_forward.4} parent=31 // pred_fallthru
        _
    $region32: #{attention_forward.4} parent=5 // pred_fallthru
      _
    %p588 = scmp.le.s32.totalorder 2, %s9
    // Predicated region
    $region45: #{attention_forward.4} parent=5 // pred_check
      %p589 = pneg %p588
    $region46: #{attention_forward.4} parent=5 // pred_check_branch
      %591 = sbr.rel (%p589) target = $region48
    $region47: #{attention_forward.4} parent=5 // pred_region
      %s592 = ssub.s32 %s9, 2
      // Predicated region
      $region49: #{attention_forward.4} parent=47 // pred_check
        %p593 = pneg %p143
      $region50: #{attention_forward.4} parent=47 // pred_check_branch
        %595 = sbr.rel (%p593) target = $region52
      $region51: #{attention_forward.4} parent=47 // pred_region
        %p596 = scmp.lt.s32.totalorder %s22, 1
        %s597 = scalar_select %p596, %s22, 1
        %p598 = scmp.lt.s32.totalorder %s23, 0
        %s599 = scalar_select %p598, %s23, 0
        %s600 = sadd.s32 %s599, %s597
        %s601 = smul.addr %s600, 4
        %s602 = scalar_lea.vmem %s3, %s601
      $region52: #{attention_forward.4} parent=47 // pred_fallthru
        _
    $region48: #{attention_forward.4} parent=5 // pred_fallthru
      _
  $region6: #{attention_forward.4} parent=0 // loop_footer
    %s13 = sadd.s32 1, %s9
  $region7: #{attention_forward.4} parent=0 // loop_footer_branch
    %8 = sbr.rel target = $region3
  $region8: #{attention_forward.4} parent=0 // loop_exit
    _

</llo_original>
